<compile_context>
chip_gen: v7x
topology: tpu7x:2x2x1
jax: 0.10.0
libtpu: 0.0.40
codegen_flags: <defaults>
</compile_context>

<pallas_src>
import functools

import jax
import jax.numpy as jnp
from jax import lax
from jax.experimental import pallas as pl
from jax.experimental.pallas import tpu as pltpu

_LANE = 128


def _pad_dim(d, multiple=_LANE):
    return max(multiple, ((d + multiple - 1) // multiple) * multiple)


def _pick_batch_tile(batch, max_tb=8):
    """Largest divisor of `batch` that is <= max_tb (batches folded per grid step)."""
    tb = min(batch, max_tb)
    while batch % tb:
        tb -= 1
    return tb


def _make_fused_kernel(n_layers, tb, tile_n, c, c_pad, n_points,
                       tiles_per_split, ragged):
    """Fused [Linear+ReLU] x n_layers over TB*tile_n points, then per-batch
    8-row partial maxes accumulated into the VMEM-resident output block."""

    def kernel(x_ref, *rest):
        o_ref = rest[-1]
        wb = rest[:-1]
        s = pl.program_id(1)                 # point-split index   (parallel)
        r = pl.program_id(2)                 # point-tile index    (reduction)
        m = tb * tile_n

        # Native-C input; zero lane-pad to 128 in VMEM (exact: weight rows >= C
        # are zero), fold TB batches into one MXU M dimension.
        x = x_ref[...]                                      # (tb, tile_n, c) f32
        if c < c_pad:
            x = jnp.concatenate(
                [x, jnp.zeros((tb, tile_n, c_pad - c), x.dtype)], axis=-1)
        h = x.reshape(m, c_pad).astype(jnp.bfloat16)

        for i in range(n_layers):
            w = wb[2 * i][...]                              # (din_pad, dout_pad) bf16
            b = wb[2 * i + 1][...]                          # (1, dout_pad) f32
            y = jnp.dot(h, w, preferred_element_type=jnp.float32)   # MXU, f32 acc
            y = jnp.maximum(y + b, 0.0)                     # f32 bias + ReLU epilogue
            h = y.astype(jnp.bfloat16) if i < n_layers - 1 else y
        # h: (m, out_pad) f32, all entries >= 0 (post-ReLU)

        if ragged:
            base = (s * tiles_per_split + r) * tile_n
            row_ids = lax.broadcasted_iota(jnp.int32, (tile_n, 1), 0) + base
            valid = row_ids < n_points                      # (tile_n, 1)

        # Per-batch VPU tree max down to an 8-row slab (no XLU reduce/broadcast).
        partials = []
        for bi in range(tb):
            hb = h[bi * tile_n:(bi + 1) * tile_n]           # (tile_n, out_pad)
            if ragged:
                hb = jnp.where(valid, hb, 0.0)              # exact: true max >= 0
            n_rows = tile_n
            while n_rows > 8:                               # tile_n is 8 * 2^k
                n_rows //= 2
                hb = jnp.maximum(hb[:n_rows], hb[n_rows:2 * n_rows])
            partials.append(hb)                             # (8, out_pad) f32

        # Running max across the innermost ("arbitrary") point-tile axis only.
        @pl.when(r == 0)
        def _init():
            for bi in range(tb):
                o_ref[bi, 0] = partials[bi]

        @pl.when(r > 0)
        def _accumulate():
            for bi in range(tb):
                o_ref[bi, 0] = jnp.maximum(o_ref[bi, 0], partials[bi])

    return kernel


def init_pointnet_params(key, dims):
    """torch.nn.Linear-style U(-1/sqrt(fan_in), 1/sqrt(fan_in)); W stored as (in, out)."""
    params = []
    n_layers = len(dims) - 1
    keys = jax.random.split(key, 2 * n_layers)
    for i in range(n_layers):
        din, dout = dims[i], dims[i + 1]
        bound = 1.0 / jnp.sqrt(jnp.float32(din))
        w = jax.random.uniform(keys[2 * i], (din, dout), jnp.float32, -bound, bound)
        b = jax.random.uniform(keys[2 * i + 1], (1, dout), jnp.float32, -bound, bound)
        params.append((w, b))
    return params


def pad_params_for_kernel(params):
    """Zero-pad feature dims to 128 lanes; weights pre-cast to bf16, biases stay f32."""
    padded = []
    for w, b in params:
        din, dout = w.shape
        dp, op = _pad_dim(din), _pad_dim(dout)
        wp = jnp.zeros((dp, op), jnp.float32).at[:din, :dout].set(w).astype(jnp.bfloat16)
        bp = jnp.zeros((1, op), jnp.float32).at[:, :dout].set(b)
        padded.append((wp, bp))
    return padded


def pointnet_encoder_forward(feats, padded_params, *, out_dim,
                             tile_n=512, max_batch_per_step=8,
                             n_point_splits=1):
    """Matches PointNetEncoder.forward for 2-D (N, C) or 3-D (B, N, C) inputs.

    tile_n            : point rows per grid step (sweepable; rounded to a power
                        of two >= 8 and clamped to the point count).
    max_batch_per_step: how many batches to fold into one matmul M.
    n_point_splits    : optional extra parallel grid axis over point tiles
                        (v7x: keeps both TensorCores busy when B == 1).
    """
    squeeze_batch = feats.ndim == 2
    if squeeze_batch:
        feats = feats[None]
    batch, n_points, c = feats.shape

    n_layers = len(padded_params)
    c_pad = padded_params[0][0].shape[0]
    out_pad = padded_params[-1][0].shape[1]
    assert c <= c_pad

    # Point tiling: power-of-two tile, large by default, never bigger than needed.
    tile_n = max(8, pl.next_power_of_2(int(tile_n)))
    tile_n = min(tile_n, max(8, pl.next_power_of_2(n_points)))
    num_tiles = pl.cdiv(n_points, tile_n)

    n_splits = (n_point_splits
                if (n_point_splits > 1 and num_tiles % n_point_splits == 0) else 1)
    tiles_per_split = num_tiles // n_splits
    ragged = (n_splits * tiles_per_split * tile_n) != n_points

    tb = _pick_batch_tile(batch, max_batch_per_step)
    num_b_tiles = batch // tb

    # Input at native channel width (no host-side lane pad / point pad copies).
    in_specs = [pl.BlockSpec((tb, tile_n, c),
                             lambda bt, s, r: (bt, s * tiles_per_split + r, 0))]
    flat_params = []
    for w, bias in padded_params:
        in_specs.append(pl.BlockSpec(w.shape, lambda bt, s, r: (0, 0)))     # DMA'd once
        in_specs.append(pl.BlockSpec(bias.shape, lambda bt, s, r: (0, 0)))  # DMA'd once
        flat_params.extend((w, bias))

    out_specs = pl.BlockSpec((tb, 1, 8, out_pad), lambda bt, s, r: (bt, s, 0, 0))

    # Cost estimate + explicit VMEM budget (re-derived; safe on v7x's 64 MiB).
    param_bytes = sum(int(w.size) * 2 + int(b.size) * 4 for w, b in padded_params)
    flops = 2 * batch * n_splits * tiles_per_split * tile_n * sum(
        int(w.shape[0]) * int(w.shape[1]) for w, _ in padded_params)
    bytes_accessed = int(feats.size) * 4 + param_bytes + batch * n_splits * 8 * out_pad * 4

    x_block = tb * tile_n * c * 4
    act_block = tb * tile_n * max(int(w.shape[1]) for w, _ in padded_params) * 4
    out_block = tb * 8 * out_pad * 4
    vmem_est = 2 * x_block + 2 * out_block + 2 * param_bytes + 8 * act_block
    vmem_limit = int(min(max(vmem_est, 16 * 2 ** 20), 64 * 2 ** 20))

    out = pl.pallas_call(
        _make_fused_kernel(n_layers, tb, tile_n, c, c_pad, n_points,
                           tiles_per_split, ragged),
        out_shape=jax.ShapeDtypeStruct((batch, n_splits, 8, out_pad), jnp.float32),
        grid=(num_b_tiles, n_splits, tiles_per_split),
        in_specs=in_specs,
        out_specs=out_specs,
        compiler_params=pltpu.CompilerParams(
            dimension_semantics=("parallel", "parallel", "arbitrary"),
            vmem_limit_bytes=vmem_limit),
        cost_estimate=pl.CostEstimate(flops=flops, transcendentals=0,
                                      bytes_accessed=bytes_accessed),
    )(feats.astype(jnp.float32), *flat_params)

    # Final tiny reduction (over the 8 partial rows and any point splits) plus
    # slicing off the padded output columns happens outside the kernel.
    pooled = jnp.max(out[..., :out_dim], axis=(1, 2))       # (batch, out_dim)
    return pooled[0] if squeeze_batch else pooled


def _reference_forward(feats, params):
    """Pure-JAX reference with the same bf16 matmul rounding as the kernel."""
    if feats.ndim == 3:
        b, n, _ = feats.shape
        h = feats.reshape(-1, feats.shape[-1]).astype(jnp.float32)
    else:
        h = feats.astype(jnp.float32)
    for w, bias in params:
        y = jnp.dot(h.astype(jnp.bfloat16), w.astype(jnp.bfloat16),
                    preferred_element_type=jnp.float32) + bias
        h = jnp.maximum(y, 0.0)
    if feats.ndim == 3:
        return jnp.max(h.reshape(b, n, -1), axis=1)
    return jnp.max(h, axis=0)


if __name__ == "__main__":
    key = jax.random.PRNGKey(0)
    k_x, k_p = jax.random.split(key)

    # Small shapes consistent with the module (n_layers > 2 required).
    batch = 2
    n_particles = 256
    n_layers = 3
    in_dim = 3
    hidden_dim = 64
    out_dim = 32

    dims = [in_dim] + [hidden_dim] * (n_layers - 1) + [out_dim]
    params = init_pointnet_params(k_p, dims)
    padded_params = pad_params_for_kernel(params)

    feats = jax.random.normal(k_x, (batch, n_particles, in_dim), jnp.float32)

    fwd = jax.jit(functools.partial(pointnet_encoder_forward, out_dim=out_dim))

    # 3-D path: (B, N, C) -> (B, out_dim); TB=2 batches folded into one grid step.
    out3 = jax.block_until_ready(fwd(feats, padded_params))
    ref3 = _reference_forward(feats, params)
    assert out3.shape == (batch, out_dim)
    assert jnp.allclose(out3, ref3, atol=1e-3, rtol=1e-3), float(jnp.max(jnp.abs(out3 - ref3)))

    # 2-D path: (N, C) -> (out_dim,)
    feats2d = feats[0]
    out2 = jax.block_until_ready(fwd(feats2d, padded_params))
    ref2 = _reference_forward(feats2d, params)
    assert out2.shape == (out_dim,)
    assert jnp.allclose(out2, ref2, atol=1e-3, rtol=1e-3), float(jnp.max(jnp.abs(out2 - ref2)))

    # Ragged point count + small tiles + point-axis split (v7x dual-core path):
    # exercises the in-kernel mask and the multi-split output reduction.
    feats_rag = feats2d[:250]
    fwd_rag = jax.jit(functools.partial(pointnet_encoder_forward, out_dim=out_dim,
                                        tile_n=64, n_point_splits=2))
    out_rag = jax.block_until_ready(fwd_rag(feats_rag, padded_params))
    ref_rag = _reference_forward(feats_rag, params)
    assert out_rag.shape == (out_dim,)
    assert jnp.allclose(out_rag, ref_rag, atol=1e-3, rtol=1e-3), \
        float(jnp.max(jnp.abs(out_rag - ref_rag)))

    print("KERNEL_OK")
</pallas_src>

<mosaic_0001>
module attributes {stable_mosaic.version = 11 : i64} {
  func.func @kernel(%arg0: i32, %arg1: i32, %arg2: i32, %arg3: memref<2x256x3xf32, #tpu.memory_space<vmem>>, %arg4: memref<128x128xbf16, #tpu.memory_space<vmem>>, %arg5: memref<1x128xf32, #tpu.memory_space<vmem>>, %arg6: memref<128x128xbf16, #tpu.memory_space<vmem>>, %arg7: memref<1x128xf32, #tpu.memory_space<vmem>>, %arg8: memref<128x128xbf16, #tpu.memory_space<vmem>>, %arg9: memref<1x128xf32, #tpu.memory_space<vmem>>, %arg10: memref<2x1x8x128xf32, #tpu.memory_space<vmem>>) attributes {dimension_semantics = [#tpu.dimension_semantics<parallel>, #tpu.dimension_semantics<parallel>, #tpu.dimension_semantics<arbitrary>], iteration_bounds = array<i64: 1, 1, 1>, scalar_prefetch = 0 : i64, scratch_operands = 0 : i64, tpu.core_type = #tpu.core_type<tc>, window_params = [{transform_indices = @transform_0, window_bounds = array<i64: 2, 256, 3>}, {pipeline_mode = #tpu.pipeline_mode<synchronous>, transform_indices = @transform_1, window_bounds = array<i64: 128, 128>}, {pipeline_mode = #tpu.pipeline_mode<synchronous>, transform_indices = @transform_2, window_bounds = array<i64: 1, 128>}, {pipeline_mode = #tpu.pipeline_mode<synchronous>, transform_indices = @transform_3, window_bounds = array<i64: 128, 128>}, {pipeline_mode = #tpu.pipeline_mode<synchronous>, transform_indices = @transform_4, window_bounds = array<i64: 1, 128>}, {pipeline_mode = #tpu.pipeline_mode<synchronous>, transform_indices = @transform_5, window_bounds = array<i64: 128, 128>}, {pipeline_mode = #tpu.pipeline_mode<synchronous>, transform_indices = @transform_6, window_bounds = array<i64: 1, 128>}, {transform_indices = @transform_7, window_bounds = array<i64: 2, 1, 8, 128>}]} {
    %c0 = arith.constant 0 : index
    %c0_0 = arith.constant 0 : index
    %c0_1 = arith.constant 0 : index
    %0 = vector.load %arg3[%c0, %c0_0, %c0_1] : memref<2x256x3xf32, #tpu.memory_space<vmem>>, vector<2x256x3xf32>
    %cst = arith.constant 0.000000e+00 : f32
    %1 = vector.broadcast %cst : f32 to vector<2x256x125xf32>
    %2 = tpu.concatenate %0, %1 in 2 : vector<2x256x3xf32>, vector<2x256x125xf32> -> vector<2x256x128xf32>
    %3 = vector.shape_cast %2 : vector<2x256x128xf32> to vector<512x128xf32>
    %4 = arith.truncf %3 : vector<512x128xf32> to vector<512x128xbf16>
    %c0_2 = arith.constant 0 : index
    %c0_3 = arith.constant 0 : index
    %5 = vector.load %arg4[%c0_2, %c0_3] : memref<128x128xbf16, #tpu.memory_space<vmem>>, vector<128x128xbf16>
    %c0_4 = arith.constant 0 : index
    %c0_5 = arith.constant 0 : index
    %6 = vector.load %arg5[%c0_4, %c0_5] : memref<1x128xf32, #tpu.memory_space<vmem>>, vector<1x128xf32>
    %cst_6 = arith.constant dense<0.000000e+00> : vector<512x128xf32>
    %7 = tpu.matmul %4, %5, %cst_6 {dimension_numbers = #tpu.dot_dimension_numbers<[1], [0], [0], [1], [0, 0, 1, 1], [], []>} : vector<512x128xbf16>, vector<128x128xbf16>, vector<512x128xf32> -> vector<512x128xf32>
    %8 = vector.broadcast %6 : vector<1x128xf32> to vector<512x128xf32>
    %9 = arith.addf %7, %8 : vector<512x128xf32>
    %cst_7 = arith.constant 0.000000e+00 : f32
    %10 = vector.broadcast %cst_7 : f32 to vector<512x128xf32>
    %11 = arith.maximumf %9, %10 : vector<512x128xf32>
    %12 = arith.truncf %11 : vector<512x128xf32> to vector<512x128xbf16>
    %c0_8 = arith.constant 0 : index
    %c0_9 = arith.constant 0 : index
    %13 = vector.load %arg6[%c0_8, %c0_9] : memref<128x128xbf16, #tpu.memory_space<vmem>>, vector<128x128xbf16>
    %c0_10 = arith.constant 0 : index
    %c0_11 = arith.constant 0 : index
    %14 = vector.load %arg7[%c0_10, %c0_11] : memref<1x128xf32, #tpu.memory_space<vmem>>, vector<1x128xf32>
    %cst_12 = arith.constant dense<0.000000e+00> : vector<512x128xf32>
    %15 = tpu.matmul %12, %13, %cst_12 {dimension_numbers = #tpu.dot_dimension_numbers<[1], [0], [0], [1], [0, 0, 1, 1], [], []>} : vector<512x128xbf16>, vector<128x128xbf16>, vector<512x128xf32> -> vector<512x128xf32>
    %16 = vector.broadcast %14 : vector<1x128xf32> to vector<512x128xf32>
    %17 = arith.addf %15, %16 : vector<512x128xf32>
    %cst_13 = arith.constant 0.000000e+00 : f32
    %18 = vector.broadcast %cst_13 : f32 to vector<512x128xf32>
    %19 = arith.maximumf %17, %18 : vector<512x128xf32>
    %20 = arith.truncf %19 : vector<512x128xf32> to vector<512x128xbf16>
    %c0_14 = arith.constant 0 : index
    %c0_15 = arith.constant 0 : index
    %21 = vector.load %arg8[%c0_14, %c0_15] : memref<128x128xbf16, #tpu.memory_space<vmem>>, vector<128x128xbf16>
    %c0_16 = arith.constant 0 : index
    %c0_17 = arith.constant 0 : index
    %22 = vector.load %arg9[%c0_16, %c0_17] : memref<1x128xf32, #tpu.memory_space<vmem>>, vector<1x128xf32>
    %cst_18 = arith.constant dense<0.000000e+00> : vector<512x128xf32>
    %23 = tpu.matmul %20, %21, %cst_18 {dimension_numbers = #tpu.dot_dimension_numbers<[1], [0], [0], [1], [0, 0, 1, 1], [], []>} : vector<512x128xbf16>, vector<128x128xbf16>, vector<512x128xf32> -> vector<512x128xf32>
    %24 = vector.broadcast %22 : vector<1x128xf32> to vector<512x128xf32>
    %25 = arith.addf %23, %24 : vector<512x128xf32>
    %cst_19 = arith.constant 0.000000e+00 : f32
    %26 = vector.broadcast %cst_19 : f32 to vector<512x128xf32>
    %27 = arith.maximumf %25, %26 : vector<512x128xf32>
    %28 = vector.extract_strided_slice %27 {offsets = [0, 0], sizes = [256, 128], strides = [1, 1]} : vector<512x128xf32> to vector<256x128xf32>
    %29 = vector.extract_strided_slice %28 {offsets = [0, 0], sizes = [128, 128], strides = [1, 1]} : vector<256x128xf32> to vector<128x128xf32>
    %30 = vector.extract_strided_slice %28 {offsets = [128, 0], sizes = [128, 128], strides = [1, 1]} : vector<256x128xf32> to vector<128x128xf32>
    %31 = arith.maximumf %29, %30 : vector<128x128xf32>
    %32 = vector.extract_strided_slice %31 {offsets = [0, 0], sizes = [64, 128], strides = [1, 1]} : vector<128x128xf32> to vector<64x128xf32>
    %33 = vector.extract_strided_slice %31 {offsets = [64, 0], sizes = [64, 128], strides = [1, 1]} : vector<128x128xf32> to vector<64x128xf32>
    %34 = arith.maximumf %32, %33 : vector<64x128xf32>
    %35 = vector.extract_strided_slice %34 {offsets = [0, 0], sizes = [32, 128], strides = [1, 1]} : vector<64x128xf32> to vector<32x128xf32>
    %36 = vector.extract_strided_slice %34 {offsets = [32, 0], sizes = [32, 128], strides = [1, 1]} : vector<64x128xf32> to vector<32x128xf32>
    %37 = arith.maximumf %35, %36 : vector<32x128xf32>
    %38 = vector.extract_strided_slice %37 {offsets = [0, 0], sizes = [16, 128], strides = [1, 1]} : vector<32x128xf32> to vector<16x128xf32>
    %39 = vector.extract_strided_slice %37 {offsets = [16, 0], sizes = [16, 128], strides = [1, 1]} : vector<32x128xf32> to vector<16x128xf32>
    %40 = arith.maximumf %38, %39 : vector<16x128xf32>
    %41 = vector.extract_strided_slice %40 {offsets = [0, 0], sizes = [8, 128], strides = [1, 1]} : vector<16x128xf32> to vector<8x128xf32>
    %42 = vector.extract_strided_slice %40 {offsets = [8, 0], sizes = [8, 128], strides = [1, 1]} : vector<16x128xf32> to vector<8x128xf32>
    %43 = arith.maximumf %41, %42 : vector<8x128xf32>
    %44 = vector.extract_strided_slice %27 {offsets = [256, 0], sizes = [256, 128], strides = [1, 1]} : vector<512x128xf32> to vector<256x128xf32>
    %45 = vector.extract_strided_slice %44 {offsets = [0, 0], sizes = [128, 128], strides = [1, 1]} : vector<256x128xf32> to vector<128x128xf32>
    %46 = vector.extract_strided_slice %44 {offsets = [128, 0], sizes = [128, 128], strides = [1, 1]} : vector<256x128xf32> to vector<128x128xf32>
    %47 = arith.maximumf %45, %46 : vector<128x128xf32>
    %48 = vector.extract_strided_slice %47 {offsets = [0, 0], sizes = [64, 128], strides = [1, 1]} : vector<128x128xf32> to vector<64x128xf32>
    %49 = vector.extract_strided_slice %47 {offsets = [64, 0], sizes = [64, 128], strides = [1, 1]} : vector<128x128xf32> to vector<64x128xf32>
    %50 = arith.maximumf %48, %49 : vector<64x128xf32>
    %51 = vector.extract_strided_slice %50 {offsets = [0, 0], sizes = [32, 128], strides = [1, 1]} : vector<64x128xf32> to vector<32x128xf32>
    %52 = vector.extract_strided_slice %50 {offsets = [32, 0], sizes = [32, 128], strides = [1, 1]} : vector<64x128xf32> to vector<32x128xf32>
    %53 = arith.maximumf %51, %52 : vector<32x128xf32>
    %54 = vector.extract_strided_slice %53 {offsets = [0, 0], sizes = [16, 128], strides = [1, 1]} : vector<32x128xf32> to vector<16x128xf32>
    %55 = vector.extract_strided_slice %53 {offsets = [16, 0], sizes = [16, 128], strides = [1, 1]} : vector<32x128xf32> to vector<16x128xf32>
    %56 = arith.maximumf %54, %55 : vector<16x128xf32>
    %57 = vector.extract_strided_slice %56 {offsets = [0, 0], sizes = [8, 128], strides = [1, 1]} : vector<16x128xf32> to vector<8x128xf32>
    %58 = vector.extract_strided_slice %56 {offsets = [8, 0], sizes = [8, 128], strides = [1, 1]} : vector<16x128xf32> to vector<8x128xf32>
    %59 = arith.maximumf %57, %58 : vector<8x128xf32>
    %c0_i32 = arith.constant 0 : i32
    %60 = arith.cmpi eq, %arg2, %c0_i32 : i32
    %61 = arith.extui %60 : i1 to i32
    %c0_i32_20 = arith.constant 0 : i32
    %62 = arith.cmpi ne, %61, %c0_i32_20 : i32
    scf.if %62 {
      %c0_23 = arith.constant 0 : index
      %c0_24 = arith.constant 0 : index
      %c0_25 = arith.constant 0 : index
      %c0_26 = arith.constant 0 : index
      %66 = vector.load %arg10[%c0_23, %c0_24, %c0_25, %c0_26] : memref<2x1x8x128xf32, #tpu.memory_space<vmem>>, vector<1x1x8x128xf32>
      %67 = vector.shape_cast %66 : vector<1x1x8x128xf32> to vector<8x128xf32>
      %68 = vector.shape_cast %43 : vector<8x128xf32> to vector<1x1x8x128xf32>
      tpu.vector_store %arg10[%c0_23, %c0_24, %c0_25, %c0_26], %68 {strides = array<i32>} : memref<2x1x8x128xf32, #tpu.memory_space<vmem>>, vector<1x1x8x128xf32>,
      %c1 = arith.constant 1 : index
      %c0_27 = arith.constant 0 : index
      %c0_28 = arith.constant 0 : index
      %c0_29 = arith.constant 0 : index
      %69 = vector.load %arg10[%c1, %c0_27, %c0_28, %c0_29] : memref<2x1x8x128xf32, #tpu.memory_space<vmem>>, vector<1x1x8x128xf32>
      %70 = vector.shape_cast %69 : vector<1x1x8x128xf32> to vector<8x128xf32>
      %71 = vector.shape_cast %59 : vector<8x128xf32> to vector<1x1x8x128xf32>
      tpu.vector_store %arg10[%c1, %c0_27, %c0_28, %c0_29], %71 {strides = array<i32>} : memref<2x1x8x128xf32, #tpu.memory_space<vmem>>, vector<1x1x8x128xf32>,
    } else {
    }
    %c0_i32_21 = arith.constant 0 : i32
    %63 = arith.cmpi sgt, %arg2, %c0_i32_21 : i32
    %64 = arith.extui %63 : i1 to i32
    %c0_i32_22 = arith.constant 0 : i32
    %65 = arith.cmpi ne, %64, %c0_i32_22 : i32
    scf.if %65 {
      %c0_23 = arith.constant 0 : index
      %c0_24 = arith.constant 0 : index
      %c0_25 = arith.constant 0 : index
      %c0_26 = arith.constant 0 : index
      %66 = vector.load %arg10[%c0_23, %c0_24, %c0_25, %c0_26] : memref<2x1x8x128xf32, #tpu.memory_space<vmem>>, vector<1x1x8x128xf32>
      %67 = vector.shape_cast %66 : vector<1x1x8x128xf32> to vector<8x128xf32>
      %68 = arith.maximumf %67, %43 : vector<8x128xf32>
      %c0_27 = arith.constant 0 : index
      %c0_28 = arith.constant 0 : index
      %c0_29 = arith.constant 0 : index
      %c0_30 = arith.constant 0 : index
      %69 = vector.load %arg10[%c0_27, %c0_28, %c0_29, %c0_30] : memref<2x1x8x128xf32, #tpu.memory_space<vmem>>, vector<1x1x8x128xf32>
      %70 = vector.shape_cast %69 : vector<1x1x8x128xf32> to vector<8x128xf32>
      %71 = vector.shape_cast %68 : vector<8x128xf32> to vector<1x1x8x128xf32>
      tpu.vector_store %arg10[%c0_27, %c0_28, %c0_29, %c0_30], %71 {strides = array<i32>} : memref<2x1x8x128xf32, #tpu.memory_space<vmem>>, vector<1x1x8x128xf32>,
      %c1 = arith.constant 1 : index
      %c0_31 = arith.constant 0 : index
      %c0_32 = arith.constant 0 : index
      %c0_33 = arith.constant 0 : index
      %72 = vector.load %arg10[%c1, %c0_31, %c0_32, %c0_33] : memref<2x1x8x128xf32, #tpu.memory_space<vmem>>, vector<1x1x8x128xf32>
      %73 = vector.shape_cast %72 : vector<1x1x8x128xf32> to vector<8x128xf32>
      %74 = arith.maximumf %73, %59 : vector<8x128xf32>
      %c1_34 = arith.constant 1 : index
      %c0_35 = arith.constant 0 : index
      %c0_36 = arith.constant 0 : index
      %c0_37 = arith.constant 0 : index
      %75 = vector.load %arg10[%c1_34, %c0_35, %c0_36, %c0_37] : memref<2x1x8x128xf32, #tpu.memory_space<vmem>>, vector<1x1x8x128xf32>
      %76 = vector.shape_cast %75 : vector<1x1x8x128xf32> to vector<8x128xf32>
      %77 = vector.shape_cast %74 : vector<8x128xf32> to vector<1x1x8x128xf32>
      tpu.vector_store %arg10[%c1_34, %c0_35, %c0_36, %c0_37], %77 {strides = array<i32>} : memref<2x1x8x128xf32, #tpu.memory_space<vmem>>, vector<1x1x8x128xf32>,
    } else {
    }
    return
  }
  func.func @transform_0(%arg0: i32, %arg1: i32, %arg2: i32) -> (i32, i32, i32) {
    %c1_i32 = arith.constant 1 : i32
    %0 = arith.muli %arg1, %c1_i32 : i32
    %1 = arith.addi %0, %arg2 : i32
    %c0_i32 = arith.constant 0 : i32
    %c0_i32_0 = arith.constant 0 : i32
    return %arg0, %1, %c0_i32 : i32, i32, i32
  }
  func.func @transform_1(%arg0: i32, %arg1: i32, %arg2: i32) -> (i32, i32) {
    %c0_i32 = arith.constant 0 : i32
    %c0_i32_0 = arith.constant 0 : i32
    %c0_i32_1 = arith.constant 0 : i32
    return %c0_i32, %c0_i32_0 : i32, i32
  }
  func.func @transform_2(%arg0: i32, %arg1: i32, %arg2: i32) -> (i32, i32) {
    %c0_i32 = arith.constant 0 : i32
    %c0_i32_0 = arith.constant 0 : i32
    %c0_i32_1 = arith.constant 0 : i32
    return %c0_i32, %c0_i32_0 : i32, i32
  }
  func.func @transform_3(%arg0: i32, %arg1: i32, %arg2: i32) -> (i32, i32) {
    %c0_i32 = arith.constant 0 : i32
    %c0_i32_0 = arith.constant 0 : i32
    %c0_i32_1 = arith.constant 0 : i32
    return %c0_i32, %c0_i32_0 : i32, i32
  }
  func.func @transform_4(%arg0: i32, %arg1: i32, %arg2: i32) -> (i32, i32) {
    %c0_i32 = arith.constant 0 : i32
    %c0_i32_0 = arith.constant 0 : i32
    %c0_i32_1 = arith.constant 0 : i32
    return %c0_i32, %c0_i32_0 : i32, i32
  }
  func.func @transform_5(%arg0: i32, %arg1: i32, %arg2: i32) -> (i32, i32) {
    %c0_i32 = arith.constant 0 : i32
    %c0_i32_0 = arith.constant 0 : i32
    %c0_i32_1 = arith.constant 0 : i32
    return %c0_i32, %c0_i32_0 : i32, i32
  }
  func.func @transform_6(%arg0: i32, %arg1: i32, %arg2: i32) -> (i32, i32) {
    %c0_i32 = arith.constant 0 : i32
    %c0_i32_0 = arith.constant 0 : i32
    %c0_i32_1 = arith.constant 0 : i32
    return %c0_i32, %c0_i32_0 : i32, i32
  }
  func.func @transform_7(%arg0: i32, %arg1: i32, %arg2: i32) -> (i32, i32, i32, i32) {
    %c0_i32 = arith.constant 0 : i32
    %c0_i32_0 = arith.constant 0 : i32
    %c0_i32_1 = arith.constant 0 : i32
    return %arg0, %arg1, %c0_i32, %c0_i32_0 : i32, i32, i32, i32
  }
}

</mosaic_0001>

<llo_original>
// kernel: pointnet_encoder_forward.1
$region0: #{pointnet_encoder_forward.1}
  #allocation0 [shape = 'u32[]', space=smem, size = 0x4, offset = 0x4, fixed_abs, tag = 'smem constant byte address 0x4 - core index']
  #allocation1 [shape = 'u32[144,128]{1,0:T(1,128)}', space=vmem, size = 0x12000, scoped, tag = 'internal scratch']
  %s0 = inlined_call_operand.vmem [shape: f32[2,256,3], index: 0, kind: input, shape index: {}]
  %s1 = inlined_call_operand.vmem [shape: bf16[128,128], index: 1, kind: input, shape index: {}]
  %s2 = inlined_call_operand.vmem [shape: f32[1,128], index: 2, kind: input, shape index: {}]
  %s3 = inlined_call_operand.vmem [shape: bf16[128,128], index: 3, kind: input, shape index: {}]
  %s4 = inlined_call_operand.vmem [shape: f32[1,128], index: 4, kind: input, shape index: {}]
  %s5 = inlined_call_operand.vmem [shape: bf16[128,128], index: 5, kind: input, shape index: {}]
  %s6 = inlined_call_operand.vmem [shape: f32[1,128], index: 6, kind: input, shape index: {}]
  %s7 = inlined_call_operand.vmem [shape: f32[2,1,8,128], index: 7, kind: output, shape index: {}]
  %s8 = sld [smem:[#allocation0]]
  $region46: #{pointnet_encoder_forward.1} parent=0
    _
  %s10 = ssub.s32 1, %s8
  %s11 = scalar_select 0, %s10, %s8
  // Predicated region
  $region2: #{pointnet_encoder_forward.1} parent=0 // pred_check
    _
  $region3: #{pointnet_encoder_forward.1} parent=0 // pred_check_branch
    %13 = sbr.rel (0) target = $region5
  $region4: #{pointnet_encoder_forward.1} parent=0 // pred_region
    %s14 = sadd.s32 0, 0
    %s15 = smul.u32 32, %s14
    %p16 = scmp.lt.s32.totalorder %s15, 31
    %s17 = scalar_select %p16, %s15, 31
    %s18 = smul.addr %s17, 8
    %s19 = scalar_lea.vmem %s0, %s18
    %s20 = sadd.s32 0, 0
    %s21 = smul.u32 32, %s20
  $region5: #{pointnet_encoder_forward.1} parent=0 // pred_fallthru
    _
  // Predicated region
  $region6: #{pointnet_encoder_forward.1} parent=0 // pred_check
    _
  $region7: #{pointnet_encoder_forward.1} parent=0 // pred_check_branch
    %23 = sbr.rel (0) target = $region9
  $region8: #{pointnet_encoder_forward.1} parent=0 // pred_region
    _
  $region9: #{pointnet_encoder_forward.1} parent=0 // pred_fallthru
    _
  // Predicated region
  $region10: #{pointnet_encoder_forward.1} parent=0 // pred_check
    _
  $region11: #{pointnet_encoder_forward.1} parent=0 // pred_check_branch
    %25 = sbr.rel (0) target = $region13
  $region12: #{pointnet_encoder_forward.1} parent=0 // pred_region
    _
  $region13: #{pointnet_encoder_forward.1} parent=0 // pred_fallthru
    _
  // Predicated region
  $region14: #{pointnet_encoder_forward.1} parent=0 // pred_check
    _
  $region15: #{pointnet_encoder_forward.1} parent=0 // pred_check_branch
    %27 = sbr.rel (0) target = $region17
  $region16: #{pointnet_encoder_forward.1} parent=0 // pred_region
    _
  $region17: #{pointnet_encoder_forward.1} parent=0 // pred_fallthru
    _
  // Predicated region
  $region18: #{pointnet_encoder_forward.1} parent=0 // pred_check
    _
  $region19: #{pointnet_encoder_forward.1} parent=0 // pred_check_branch
    %29 = sbr.rel (0) target = $region21
  $region20: #{pointnet_encoder_forward.1} parent=0 // pred_region
    _
  $region21: #{pointnet_encoder_forward.1} parent=0 // pred_fallthru
    _
  // Predicated region
  $region22: #{pointnet_encoder_forward.1} parent=0 // pred_check
    _
  $region23: #{pointnet_encoder_forward.1} parent=0 // pred_check_branch
    %31 = sbr.rel (0) target = $region25
  $region24: #{pointnet_encoder_forward.1} parent=0 // pred_region
    _
  $region25: #{pointnet_encoder_forward.1} parent=0 // pred_fallthru
    _
  // Predicated region
  $region26: #{pointnet_encoder_forward.1} parent=0 // pred_check
    _
  $region27: #{pointnet_encoder_forward.1} parent=0 // pred_check_branch
    %33 = sbr.rel (0) target = $region29
  $region28: #{pointnet_encoder_forward.1} parent=0 // pred_region
    _
  $region29: #{pointnet_encoder_forward.1} parent=0 // pred_fallthru
    _
  %s34 = sadd.s32 0, 0
  %s35 = smul.u32 32, %s34
  %p36 = scmp.lt.s32.totalorder %s35, 31
  %s37 = scalar_select %p36, %s35, 31
  %s38 = smul.addr %s37, 8
  %s39 = scalar_lea.vmem %s0, %s38
  %s40 = sadd.s32 0, 0
  %s41 = smul.u32 32, %s40
  %p42 = scmp.lt.s32.totalorder %s41, 31
  %s43 = scalar_select %p42, %s41, 31
  %s44 = smul.addr %s43, 8
  %s45 = scalar_lea.vmem %s0, %s44
  %s46 = sadd.s32 0, 0
  %s47 = smul.u32 32, %s46
  %v49 = vld [vmem:[%s45] sm:$0xff]
  %v50 = vld [vmem:[%s45 + $0x8] sm:$0xff]
  %v51 = vld [vmem:[%s45 + $0x10] sm:$0xff]
  %v52 = vld [vmem:[%s45 + $0x18] sm:$0xff]
  %v53 = vld [vmem:[%s45 + $0x20] sm:$0xff]
  %v54 = vld [vmem:[%s45 + $0x28] sm:$0xff]
  %v55 = vld [vmem:[%s45 + $0x30] sm:$0xff]
  %v56 = vld [vmem:[%s45 + $0x38] sm:$0xff]
  %v57 = vld [vmem:[%s45 + $0x40] sm:$0xff]
  %v58 = vld [vmem:[%s45 + $0x48] sm:$0xff]
  %v59 = vld [vmem:[%s45 + $0x50] sm:$0xff]
  %v60 = vld [vmem:[%s45 + $0x58] sm:$0xff]
  %v61 = vld [vmem:[%s45 + $0x60] sm:$0xff]
  %v62 = vld [vmem:[%s45 + $0x68] sm:$0xff]
  %v63 = vld [vmem:[%s45 + $0x70] sm:$0xff]
  %v64 = vld [vmem:[%s45 + $0x78] sm:$0xff]
  %v65 = vld [vmem:[%s45 + $0x80] sm:$0xff]
  %v66 = vld [vmem:[%s45 + $0x88] sm:$0xff]
  %v67 = vld [vmem:[%s45 + $0x90] sm:$0xff]
  %v68 = vld [vmem:[%s45 + $0x98] sm:$0xff]
  %v69 = vld [vmem:[%s45 + $0xa0] sm:$0xff]
  %v70 = vld [vmem:[%s45 + $0xa8] sm:$0xff]
  %v71 = vld [vmem:[%s45 + $0xb0] sm:$0xff]
  %v72 = vld [vmem:[%s45 + $0xb8] sm:$0xff]
  %v73 = vld [vmem:[%s45 + $0xc0] sm:$0xff]
  %v74 = vld [vmem:[%s45 + $0xc8] sm:$0xff]
  %v75 = vld [vmem:[%s45 + $0xd0] sm:$0xff]
  %v76 = vld [vmem:[%s45 + $0xd8] sm:$0xff]
  %v77 = vld [vmem:[%s45 + $0xe0] sm:$0xff]
  %v78 = vld [vmem:[%s45 + $0xe8] sm:$0xff]
  %v79 = vld [vmem:[%s45 + $0xf0] sm:$0xff]
  %v80 = vld [vmem:[%s45 + $0xf8] sm:$0xff]
  %v81 = vld [vmem:[%s45 + $0x100] sm:$0xff]
  %v82 = vld [vmem:[%s45 + $0x108] sm:$0xff]
  %v83 = vld [vmem:[%s45 + $0x110] sm:$0xff]
  %v84 = vld [vmem:[%s45 + $0x118] sm:$0xff]
  %v85 = vld [vmem:[%s45 + $0x120] sm:$0xff]
  %v86 = vld [vmem:[%s45 + $0x128] sm:$0xff]
  %v87 = vld [vmem:[%s45 + $0x130] sm:$0xff]
  %v88 = vld [vmem:[%s45 + $0x138] sm:$0xff]
  %v89 = vld [vmem:[%s45 + $0x140] sm:$0xff]
  %v90 = vld [vmem:[%s45 + $0x148] sm:$0xff]
  %v91 = vld [vmem:[%s45 + $0x150] sm:$0xff]
  %v92 = vld [vmem:[%s45 + $0x158] sm:$0xff]
  %v93 = vld [vmem:[%s45 + $0x160] sm:$0xff]
  %v94 = vld [vmem:[%s45 + $0x168] sm:$0xff]
  %v95 = vld [vmem:[%s45 + $0x170] sm:$0xff]
  %v96 = vld [vmem:[%s45 + $0x178] sm:$0xff]
  %v97 = vld [vmem:[%s45 + $0x180] sm:$0xff]
  %v98 = vld [vmem:[%s45 + $0x188] sm:$0xff]
  %v99 = vld [vmem:[%s45 + $0x190] sm:$0xff]
  %v100 = vld [vmem:[%s45 + $0x198] sm:$0xff]
  %v101 = vld [vmem:[%s45 + $0x1a0] sm:$0xff]
  %v102 = vld [vmem:[%s45 + $0x1a8] sm:$0xff]
  %v103 = vld [vmem:[%s45 + $0x1b0] sm:$0xff]
  %v104 = vld [vmem:[%s45 + $0x1b8] sm:$0xff]
  %v105 = vld [vmem:[%s45 + $0x1c0] sm:$0xff]
  %v106 = vld [vmem:[%s45 + $0x1c8] sm:$0xff]
  %v107 = vld [vmem:[%s45 + $0x1d0] sm:$0xff]
  %v108 = vld [vmem:[%s45 + $0x1d8] sm:$0xff]
  %v109 = vld [vmem:[%s45 + $0x1e0] sm:$0xff]
  %v110 = vld [vmem:[%s45 + $0x1e8] sm:$0xff]
  %v111 = vld [vmem:[%s45 + $0x1f0] sm:$0xff]
  %v112 = vld [vmem:[%s45 + $0x1f8] sm:$0xff]
  %vm113 = vcmask 23552
  %v114 = vsel %vm113, %v49, 0.0
  %v115 = vsel %vm113, %v50, 0.0
  %v116 = vsel %vm113, %v51, 0.0
  %v117 = vsel %vm113, %v52, 0.0
  %v118 = vsel %vm113, %v53, 0.0
  %v119 = vsel %vm113, %v54, 0.0
  %v120 = vsel %vm113, %v55, 0.0
  %v121 = vsel %vm113, %v56, 0.0
  %v122 = vsel %vm113, %v57, 0.0
  %v123 = vsel %vm113, %v58, 0.0
  %v124 = vsel %vm113, %v59, 0.0
  %v125 = vsel %vm113, %v60, 0.0
  %v126 = vsel %vm113, %v61, 0.0
  %v127 = vsel %vm113, %v62, 0.0
  %v128 = vsel %vm113, %v63, 0.0
  %v129 = vsel %vm113, %v64, 0.0
  %v130 = vsel %vm113, %v65, 0.0
  %v131 = vsel %vm113, %v66, 0.0
  %v132 = vsel %vm113, %v67, 0.0
  %v133 = vsel %vm113, %v68, 0.0
  %v134 = vsel %vm113, %v69, 0.0
  %v135 = vsel %vm113, %v70, 0.0
  %v136 = vsel %vm113, %v71, 0.0
  %v137 = vsel %vm113, %v72, 0.0
  %v138 = vsel %vm113, %v73, 0.0
  %v139 = vsel %vm113, %v74, 0.0
  %v140 = vsel %vm113, %v75, 0.0
  %v141 = vsel %vm113, %v76, 0.0
  %v142 = vsel %vm113, %v77, 0.0
  %v143 = vsel %vm113, %v78, 0.0
  %v144 = vsel %vm113, %v79, 0.0
  %v145 = vsel %vm113, %v80, 0.0
  %v146 = vsel %vm113, %v81, 0.0
  %v147 = vsel %vm113, %v82, 0.0
  %v148 = vsel %vm113, %v83, 0.0
  %v149 = vsel %vm113, %v84, 0.0
  %v150 = vsel %vm113, %v85, 0.0
  %v151 = vsel %vm113, %v86, 0.0
  %v152 = vsel %vm113, %v87, 0.0
  %v153 = vsel %vm113, %v88, 0.0
  %v154 = vsel %vm113, %v89, 0.0
  %v155 = vsel %vm113, %v90, 0.0
  %v156 = vsel %vm113, %v91, 0.0
  %v157 = vsel %vm113, %v92, 0.0
  %v158 = vsel %vm113, %v93, 0.0
  %v159 = vsel %vm113, %v94, 0.0
  %v160 = vsel %vm113, %v95, 0.0
  %v161 = vsel %vm113, %v96, 0.0
  %v162 = vsel %vm113, %v97, 0.0
  %v163 = vsel %vm113, %v98, 0.0
  %v164 = vsel %vm113, %v99, 0.0
  %v165 = vsel %vm113, %v100, 0.0
  %v166 = vsel %vm113, %v101, 0.0
  %v167 = vsel %vm113, %v102, 0.0
  %v168 = vsel %vm113, %v103, 0.0
  %v169 = vsel %vm113, %v104, 0.0
  %v170 = vsel %vm113, %v105, 0.0
  %v171 = vsel %vm113, %v106, 0.0
  %v172 = vsel %vm113, %v107, 0.0
  %v173 = vsel %vm113, %v108, 0.0
  %v174 = vsel %vm113, %v109, 0.0
  %v175 = vsel %vm113, %v110, 0.0
  %v176 = vsel %vm113, %v111, 0.0
  %v177 = vsel %vm113, %v112, 0.0
  %v178 = vpack.c.bf16 %v115, %v114
  %v179 = vpack.c.bf16 %v117, %v116
  %v180 = vpack.c.bf16 %v119, %v118
  %v181 = vpack.c.bf16 %v121, %v120
  %v182 = vpack.c.bf16 %v123, %v122
  %v183 = vpack.c.bf16 %v125, %v124
  %v184 = vpack.c.bf16 %v127, %v126
  %v185 = vpack.c.bf16 %v129, %v128
  %v186 = vpack.c.bf16 %v131, %v130
  %v187 = vpack.c.bf16 %v133, %v132
  %v188 = vpack.c.bf16 %v135, %v134
  %v189 = vpack.c.bf16 %v137, %v136
  %v190 = vpack.c.bf16 %v139, %v138
  %v191 = vpack.c.bf16 %v141, %v140
  %v192 = vpack.c.bf16 %v143, %v142
  %v193 = vpack.c.bf16 %v145, %v144
  %v194 = vpack.c.bf16 %v147, %v146
  %v195 = vpack.c.bf16 %v149, %v148
  %v196 = vpack.c.bf16 %v151, %v150
  %v197 = vpack.c.bf16 %v153, %v152
  %v198 = vpack.c.bf16 %v155, %v154
  %v199 = vpack.c.bf16 %v157, %v156
  %v200 = vpack.c.bf16 %v159, %v158
  %v201 = vpack.c.bf16 %v161, %v160
  %v202 = vpack.c.bf16 %v163, %v162
  %v203 = vpack.c.bf16 %v165, %v164
  %v204 = vpack.c.bf16 %v167, %v166
  %v205 = vpack.c.bf16 %v169, %v168
  %v206 = vpack.c.bf16 %v171, %v170
  %v207 = vpack.c.bf16 %v173, %v172
  %v208 = vpack.c.bf16 %v175, %v174
  %v209 = vpack.c.bf16 %v177, %v176
  %v210 = vld [vmem:[%s1] sm:$0xf]
  %v211 = vld [vmem:[%s1 + $0x4] sm:$0xf]
  %v212 = vld [vmem:[%s1 + $0x8] sm:$0xf]
  %v213 = vld [vmem:[%s1 + $0xc] sm:$0xf]
  %v214 = vld [vmem:[%s1 + $0x10] sm:$0xf]
  %v215 = vld [vmem:[%s1 + $0x14] sm:$0xf]
  %v216 = vld [vmem:[%s1 + $0x18] sm:$0xf]
  %v217 = vld [vmem:[%s1 + $0x1c] sm:$0xf]
  %v218 = vld [vmem:[%s1 + $0x20] sm:$0xf]
  %v219 = vld [vmem:[%s1 + $0x24] sm:$0xf]
  %v220 = vld [vmem:[%s1 + $0x28] sm:$0xf]
  %v221 = vld [vmem:[%s1 + $0x2c] sm:$0xf]
  %v222 = vld [vmem:[%s1 + $0x30] sm:$0xf]
  %v223 = vld [vmem:[%s1 + $0x34] sm:$0xf]
  %v224 = vld [vmem:[%s1 + $0x38] sm:$0xf]
  %v225 = vld [vmem:[%s1 + $0x3c] sm:$0xf]
  %v226 = vld [vmem:[%s2] sm:$0x1]
  %v228 = vlaneseq
  %v229 = vshrl.u32 %v228, 7
  %v230 = vsub.s32 0, %v229
  %v231 = vrot.slane %v226, %v230
  %v249 = vunpack.c.l.b16 %v210
  %v250 = vunpack.c.l.b16 %v211
  %v251 = vunpack.c.l.b16 %v212
  %v252 = vunpack.c.l.b16 %v213
  %v253 = vunpack.c.l.b16 %v214
  %v254 = vunpack.c.l.b16 %v215
  %v255 = vunpack.c.l.b16 %v216
  %v256 = vunpack.c.l.b16 %v217
  %v257 = vunpack.c.l.b16 %v218
  %v258 = vunpack.c.l.b16 %v219
  %v259 = vunpack.c.l.b16 %v220
  %v260 = vunpack.c.l.b16 %v221
  %v261 = vunpack.c.l.b16 %v222
  %v262 = vunpack.c.l.b16 %v223
  %v263 = vunpack.c.l.b16 %v224
  %v264 = vunpack.c.l.b16 %v225
  %v265 = vpack.c.b16 %v250, %v249
  %v266 = vpack.c.b16 %v252, %v251
  %v267 = vpack.c.b16 %v254, %v253
  %v268 = vpack.c.b16 %v256, %v255
  %v269 = vpack.c.b16 %v258, %v257
  %v270 = vpack.c.b16 %v260, %v259
  %v271 = vpack.c.b16 %v262, %v261
  %v272 = vpack.c.b16 %v264, %v263
  %281 = vmatprep.subr.bf16.mxu0 0
  %282 = vmatpush1.bf16.msra.mxu0 %v265
  %283 = vmatprep.subr.bf16.mxu0 0
  %284 = vmatpush1.bf16.msra.mxu0 %v266
  %285 = vmatprep.subr.bf16.mxu0 0
  %286 = vmatpush1.bf16.msra.mxu0 %v267
  %287 = vmatprep.subr.bf16.mxu0 0
  %288 = vmatpush1.bf16.msra.mxu0 %v268
  %289 = vmatprep.subr.bf16.mxu0 0
  %290 = vmatpush1.bf16.msra.mxu0 %v269
  %291 = vmatprep.subr.bf16.mxu0 0
  %292 = vmatpush1.bf16.msra.mxu0 %v270
  %293 = vmatprep.subr.bf16.mxu0 0
  %294 = vmatpush1.bf16.msra.mxu0 %v271
  %295 = vmatprep.subr.bf16.mxu0 0
  %296 = vmatpush1.bf16.msra.mxu0 %v272
  %297 = vmatprep.subr.bf16.mxu0 0
  %298 = vmatpush1.bf16.msra.mxu0 0
  %299 = vmatprep.subr.bf16.mxu0 0
  %300 = vmatpush1.bf16.msra.mxu0 0
  %301 = vmatprep.subr.bf16.mxu0 0
  %302 = vmatpush1.bf16.msra.mxu0 0
  %303 = vmatprep.subr.bf16.mxu0 0
  %304 = vmatpush1.bf16.msra.mxu0 0
  %305 = vmatprep.subr.bf16.mxu0 0
  %306 = vmatpush1.bf16.msra.mxu0 0
  %307 = vmatprep.subr.bf16.mxu0 0
  %308 = vmatpush1.bf16.msra.mxu0 0
  %309 = vmatprep.subr.bf16.mxu0 0
  %310 = vmatpush1.bf16.msra.mxu0 0
  %311 = vmatprep.subr.bf16.mxu0 0
  %312 = vmatpush1.bf16.msra.mxu0 0
  %313 = vmatprep.mubr.bf16.mxu0 0
  %314 = vmatmul.mubr.bf16.gmra.mrb[0].mxu0 %v178
  %v315 = vpop.f32.mrb[0].mxu0
  %v316 = vadd.f32 %v231, %v315
  %v317 = vpop.f32.mrb[0].mxu0
  %v318 = vpop.f32.mrb[0].mxu0
  %v319 = vadd.f32 %v231, %v318
  %v320 = vpop.f32.mrb[0].mxu0
  %321 = vmatprep.mubr.bf16.mxu0 0
  %322 = vmatmul.mubr.bf16.gmra.mrb[0].mxu0 %v179
  %v323 = vpop.f32.mrb[0].mxu0
  %v324 = vadd.f32 %v231, %v323
  %v325 = vpop.f32.mrb[0].mxu0
  %v326 = vpop.f32.mrb[0].mxu0
  %v327 = vadd.f32 %v231, %v326
  %v328 = vpop.f32.mrb[0].mxu0
  %329 = vmatprep.mubr.bf16.mxu0 0
  %330 = vmatmul.mubr.bf16.gmra.mrb[0].mxu0 %v180
  %v331 = vpop.f32.mrb[0].mxu0
  %v332 = vadd.f32 %v231, %v331
  %v333 = vpop.f32.mrb[0].mxu0
  %v334 = vpop.f32.mrb[0].mxu0
  %v335 = vadd.f32 %v231, %v334
  %v336 = vpop.f32.mrb[0].mxu0
  %337 = vmatprep.mubr.bf16.mxu0 0
  %338 = vmatmul.mubr.bf16.gmra.mrb[0].mxu0 %v181
  %v339 = vpop.f32.mrb[0].mxu0
  %v340 = vadd.f32 %v231, %v339
  %v341 = vpop.f32.mrb[0].mxu0
  %v342 = vpop.f32.mrb[0].mxu0
  %v343 = vadd.f32 %v231, %v342
  %v344 = vpop.f32.mrb[0].mxu0
  %345 = vmatprep.mubr.bf16.mxu0 0
  %346 = vmatmul.mubr.bf16.gmra.mrb[0].mxu0 %v182
  %v347 = vpop.f32.mrb[0].mxu0
  %v348 = vadd.f32 %v231, %v347
  %v349 = vpop.f32.mrb[0].mxu0
  %v350 = vpop.f32.mrb[0].mxu0
  %v351 = vadd.f32 %v231, %v350
  %v352 = vpop.f32.mrb[0].mxu0
  %353 = vmatprep.mubr.bf16.mxu0 0
  %354 = vmatmul.mubr.bf16.gmra.mrb[0].mxu0 %v183
  %v355 = vpop.f32.mrb[0].mxu0
  %v356 = vadd.f32 %v231, %v355
  %v357 = vpop.f32.mrb[0].mxu0
  %v358 = vpop.f32.mrb[0].mxu0
  %v359 = vadd.f32 %v231, %v358
  %v360 = vpop.f32.mrb[0].mxu0
  %361 = vmatprep.mubr.bf16.mxu0 0
  %362 = vmatmul.mubr.bf16.gmra.mrb[0].mxu0 %v184
  %v363 = vpop.f32.mrb[0].mxu0
  %v364 = vadd.f32 %v231, %v363
  %v365 = vpop.f32.mrb[0].mxu0
  %v366 = vpop.f32.mrb[0].mxu0
  %v367 = vadd.f32 %v231, %v366
  %v368 = vpop.f32.mrb[0].mxu0
  %369 = vmatprep.mubr.bf16.mxu0 0
  %370 = vmatmul.mubr.bf16.gmra.mrb[0].mxu0 %v185
  %v371 = vpop.f32.mrb[0].mxu0
  %v372 = vadd.f32 %v231, %v371
  %v373 = vpop.f32.mrb[0].mxu0
  %v374 = vpop.f32.mrb[0].mxu0
  %v375 = vadd.f32 %v231, %v374
  %v376 = vpop.f32.mrb[0].mxu0
  %377 = vmatprep.mubr.bf16.mxu0 0
  %378 = vmatmul.mubr.bf16.gmra.mrb[0].mxu0 %v186
  %v379 = vpop.f32.mrb[0].mxu0
  %v380 = vadd.f32 %v231, %v379
  %v381 = vpop.f32.mrb[0].mxu0
  %v382 = vpop.f32.mrb[0].mxu0
  %v383 = vadd.f32 %v231, %v382
  %v384 = vpop.f32.mrb[0].mxu0
  %385 = vmatprep.mubr.bf16.mxu0 0
  %386 = vmatmul.mubr.bf16.gmra.mrb[0].mxu0 %v187
  %v387 = vpop.f32.mrb[0].mxu0
  %v388 = vadd.f32 %v231, %v387
  %v389 = vpop.f32.mrb[0].mxu0
  %v390 = vpop.f32.mrb[0].mxu0
  %v391 = vadd.f32 %v231, %v390
  %v392 = vpop.f32.mrb[0].mxu0
  %393 = vmatprep.mubr.bf16.mxu0 0
  %394 = vmatmul.mubr.bf16.gmra.mrb[0].mxu0 %v188
  %v395 = vpop.f32.mrb[0].mxu0
  %v396 = vadd.f32 %v231, %v395
  %v397 = vpop.f32.mrb[0].mxu0
  %v398 = vpop.f32.mrb[0].mxu0
  %v399 = vadd.f32 %v231, %v398
  %v400 = vpop.f32.mrb[0].mxu0
  %401 = vmatprep.mubr.bf16.mxu0 0
  %402 = vmatmul.mubr.bf16.gmra.mrb[0].mxu0 %v189
  %v403 = vpop.f32.mrb[0].mxu0
  %v404 = vadd.f32 %v231, %v403
  %v405 = vpop.f32.mrb[0].mxu0
  %v406 = vpop.f32.mrb[0].mxu0
  %v407 = vadd.f32 %v231, %v406
  %v408 = vpop.f32.mrb[0].mxu0
  %409 = vmatprep.mubr.bf16.mxu0 0
  %410 = vmatmul.mubr.bf16.gmra.mrb[0].mxu0 %v190
  %v411 = vpop.f32.mrb[0].mxu0
  %v412 = vadd.f32 %v231, %v411
  %v413 = vpop.f32.mrb[0].mxu0
  %v414 = vpop.f32.mrb[0].mxu0
  %v415 = vadd.f32 %v231, %v414
  %v416 = vpop.f32.mrb[0].mxu0
  %417 = vmatprep.mubr.bf16.mxu0 0
  %418 = vmatmul.mubr.bf16.gmra.mrb[0].mxu0 %v191
  %v419 = vpop.f32.mrb[0].mxu0
  %v420 = vadd.f32 %v231, %v419
  %v421 = vpop.f32.mrb[0].mxu0
  %v422 = vpop.f32.mrb[0].mxu0
  %v423 = vadd.f32 %v231, %v422
  %v424 = vpop.f32.mrb[0].mxu0
  %425 = vmatprep.mubr.bf16.mxu0 0
  %426 = vmatmul.mubr.bf16.gmra.mrb[0].mxu0 %v192
  %v427 = vpop.f32.mrb[0].mxu0
  %v428 = vadd.f32 %v231, %v427
  %v429 = vpop.f32.mrb[0].mxu0
  %v430 = vpop.f32.mrb[0].mxu0
  %v431 = vadd.f32 %v231, %v430
  %v432 = vpop.f32.mrb[0].mxu0
  %433 = vmatprep.mubr.bf16.mxu0 0
  %434 = vmatmul.mubr.bf16.gmra.mrb[0].mxu0 %v193
  %v435 = vpop.f32.mrb[0].mxu0
  %v436 = vadd.f32 %v231, %v435
  %v437 = vpop.f32.mrb[0].mxu0
  %v438 = vpop.f32.mrb[0].mxu0
  %v439 = vadd.f32 %v231, %v438
  %v440 = vpop.f32.mrb[0].mxu0
  %441 = vmatprep.mubr.bf16.mxu0 0
  %442 = vmatmul.mubr.bf16.gmra.mrb[0].mxu0 %v194
  %v443 = vpop.f32.mrb[0].mxu0
  %v444 = vadd.f32 %v231, %v443
  %v445 = vpop.f32.mrb[0].mxu0
  %v446 = vpop.f32.mrb[0].mxu0
  %v447 = vadd.f32 %v231, %v446
  %v448 = vpop.f32.mrb[0].mxu0
  %449 = vmatprep.mubr.bf16.mxu0 0
  %450 = vmatmul.mubr.bf16.gmra.mrb[0].mxu0 %v195
  %v451 = vpop.f32.mrb[0].mxu0
  %v452 = vadd.f32 %v231, %v451
  %v453 = vpop.f32.mrb[0].mxu0
  %v454 = vpop.f32.mrb[0].mxu0
  %v455 = vadd.f32 %v231, %v454
  %v456 = vpop.f32.mrb[0].mxu0
  %457 = vmatprep.mubr.bf16.mxu0 0
  %458 = vmatmul.mubr.bf16.gmra.mrb[0].mxu0 %v196
  %v459 = vpop.f32.mrb[0].mxu0
  %v460 = vadd.f32 %v231, %v459
  %v461 = vpop.f32.mrb[0].mxu0
  %v462 = vpop.f32.mrb[0].mxu0
  %v463 = vadd.f32 %v231, %v462
  %v464 = vpop.f32.mrb[0].mxu0
  %465 = vmatprep.mubr.bf16.mxu0 0
  %466 = vmatmul.mubr.bf16.gmra.mrb[0].mxu0 %v197
  %v467 = vpop.f32.mrb[0].mxu0
  %v468 = vadd.f32 %v231, %v467
  %v469 = vpop.f32.mrb[0].mxu0
  %v470 = vpop.f32.mrb[0].mxu0
  %v471 = vadd.f32 %v231, %v470
  %v472 = vpop.f32.mrb[0].mxu0
  %473 = vmatprep.mubr.bf16.mxu0 0
  %474 = vmatmul.mubr.bf16.gmra.mrb[0].mxu0 %v198
  %v475 = vpop.f32.mrb[0].mxu0
  %v476 = vadd.f32 %v231, %v475
  %v477 = vpop.f32.mrb[0].mxu0
  %v478 = vpop.f32.mrb[0].mxu0
  %v479 = vadd.f32 %v231, %v478
  %v480 = vpop.f32.mrb[0].mxu0
  %481 = vmatprep.mubr.bf16.mxu0 0
  %482 = vmatmul.mubr.bf16.gmra.mrb[0].mxu0 %v199
  %v483 = vpop.f32.mrb[0].mxu0
  %v484 = vadd.f32 %v231, %v483
  %v485 = vpop.f32.mrb[0].mxu0
  %v486 = vpop.f32.mrb[0].mxu0
  %v487 = vadd.f32 %v231, %v486
  %v488 = vpop.f32.mrb[0].mxu0
  %489 = vmatprep.mubr.bf16.mxu0 0
  %490 = vmatmul.mubr.bf16.gmra.mrb[0].mxu0 %v200
  %v491 = vpop.f32.mrb[0].mxu0
  %v492 = vadd.f32 %v231, %v491
  %v493 = vpop.f32.mrb[0].mxu0
  %v494 = vpop.f32.mrb[0].mxu0
  %v495 = vadd.f32 %v231, %v494
  %v496 = vpop.f32.mrb[0].mxu0
  %497 = vmatprep.mubr.bf16.mxu0 0
  %498 = vmatmul.mubr.bf16.gmra.mrb[0].mxu0 %v201
  %v499 = vpop.f32.mrb[0].mxu0
  %v500 = vadd.f32 %v231, %v499
  %v501 = vpop.f32.mrb[0].mxu0
  %v502 = vpop.f32.mrb[0].mxu0
  %v503 = vadd.f32 %v231, %v502
  %v504 = vpop.f32.mrb[0].mxu0
  %505 = vmatprep.mubr.bf16.mxu0 0
  %506 = vmatmul.mubr.bf16.gmra.mrb[0].mxu0 %v202
  %v507 = vpop.f32.mrb[0].mxu0
  %v508 = vadd.f32 %v231, %v507
  %v509 = vpop.f32.mrb[0].mxu0
  %v510 = vpop.f32.mrb[0].mxu0
  %v511 = vadd.f32 %v231, %v510
  %v512 = vpop.f32.mrb[0].mxu0
  %513 = vmatprep.mubr.bf16.mxu0 0
  %514 = vmatmul.mubr.bf16.gmra.mrb[0].mxu0 %v203
  %v515 = vpop.f32.mrb[0].mxu0
  %v516 = vadd.f32 %v231, %v515
  %v517 = vpop.f32.mrb[0].mxu0
  %v518 = vpop.f32.mrb[0].mxu0
  %v519 = vadd.f32 %v231, %v518
  %v520 = vpop.f32.mrb[0].mxu0
  %521 = vmatprep.mubr.bf16.mxu0 0
  %522 = vmatmul.mubr.bf16.gmra.mrb[0].mxu0 %v204
  %v523 = vpop.f32.mrb[0].mxu0
  %v524 = vadd.f32 %v231, %v523
  %v525 = vpop.f32.mrb[0].mxu0
  %v526 = vpop.f32.mrb[0].mxu0
  %v527 = vadd.f32 %v231, %v526
  %v528 = vpop.f32.mrb[0].mxu0
  %529 = vmatprep.mubr.bf16.mxu0 0
  %530 = vmatmul.mubr.bf16.gmra.mrb[0].mxu0 %v205
  %v531 = vpop.f32.mrb[0].mxu0
  %v532 = vadd.f32 %v231, %v531
  %v533 = vpop.f32.mrb[0].mxu0
  %v534 = vpop.f32.mrb[0].mxu0
  %v535 = vadd.f32 %v231, %v534
  %v536 = vpop.f32.mrb[0].mxu0
  %537 = vmatprep.mubr.bf16.mxu0 0
  %538 = vmatmul.mubr.bf16.gmra.mrb[0].mxu0 %v206
  %v539 = vpop.f32.mrb[0].mxu0
  %v540 = vadd.f32 %v231, %v539
  %v541 = vpop.f32.mrb[0].mxu0
  %v542 = vpop.f32.mrb[0].mxu0
  %v543 = vadd.f32 %v231, %v542
  %v544 = vpop.f32.mrb[0].mxu0
  %545 = vmatprep.mubr.bf16.mxu0 0
  %546 = vmatmul.mubr.bf16.gmra.mrb[0].mxu0 %v207
  %v547 = vpop.f32.mrb[0].mxu0
  %v548 = vadd.f32 %v231, %v547
  %v549 = vpop.f32.mrb[0].mxu0
  %v550 = vpop.f32.mrb[0].mxu0
  %v551 = vadd.f32 %v231, %v550
  %v552 = vpop.f32.mrb[0].mxu0
  %553 = vmatprep.mubr.bf16.mxu0 0
  %554 = vmatmul.mubr.bf16.gmra.mrb[0].mxu0 %v208
  %v555 = vpop.f32.mrb[0].mxu0
  %v556 = vadd.f32 %v231, %v555
  %v557 = vpop.f32.mrb[0].mxu0
  %v558 = vpop.f32.mrb[0].mxu0
  %v559 = vadd.f32 %v231, %v558
  %v560 = vpop.f32.mrb[0].mxu0
  %561 = vmatprep.mubr.bf16.mxu0 0
  %562 = vmatmul.mubr.bf16.gmra.mrb[0].mxu0 %v209
  %v563 = vpop.f32.mrb[0].mxu0
  %v564 = vadd.f32 %v231, %v563
  %v565 = vpop.f32.mrb[0].mxu0
  %v566 = vpop.f32.mrb[0].mxu0
  %v567 = vadd.f32 %v231, %v566
  %v568 = vpop.f32.mrb[0].mxu0
  %569 = vdwg.mxu0
  %v570 = vmax.f32 %v316, 0.0
  %v571 = vmax.f32 %v319, 0.0
  %v572 = vmax.f32 %v324, 0.0
  %v573 = vmax.f32 %v327, 0.0
  %v574 = vmax.f32 %v332, 0.0
  %v575 = vmax.f32 %v335, 0.0
  %v576 = vmax.f32 %v340, 0.0
  %v577 = vmax.f32 %v343, 0.0
  %v578 = vmax.f32 %v348, 0.0
  %v579 = vmax.f32 %v351, 0.0
  %v580 = vmax.f32 %v356, 0.0
  %v581 = vmax.f32 %v359, 0.0
  %v582 = vmax.f32 %v364, 0.0
  %v583 = vmax.f32 %v367, 0.0
  %v584 = vmax.f32 %v372, 0.0
  %v585 = vmax.f32 %v375, 0.0
  %v586 = vmax.f32 %v380, 0.0
  %v587 = vmax.f32 %v383, 0.0
  %v588 = vmax.f32 %v388, 0.0
  %v589 = vmax.f32 %v391, 0.0
  %v590 = vmax.f32 %v396, 0.0
  %v591 = vmax.f32 %v399, 0.0
  %v592 = vmax.f32 %v404, 0.0
  %v593 = vmax.f32 %v407, 0.0
  %v594 = vmax.f32 %v412, 0.0
  %v595 = vmax.f32 %v415, 0.0
  %v596 = vmax.f32 %v420, 0.0
  %v597 = vmax.f32 %v423, 0.0
  %v598 = vmax.f32 %v428, 0.0
  %v599 = vmax.f32 %v431, 0.0
  %v600 = vmax.f32 %v436, 0.0
  %v601 = vmax.f32 %v439, 0.0
  %v602 = vmax.f32 %v444, 0.0
  %v603 = vmax.f32 %v447, 0.0
  %v604 = vmax.f32 %v452, 0.0
  %v605 = vmax.f32 %v455, 0.0
  %v606 = vmax.f32 %v460, 0.0
  %v607 = vmax.f32 %v463, 0.0
  %v608 = vmax.f32 %v468, 0.0
  %v609 = vmax.f32 %v471, 0.0
  %v610 = vmax.f32 %v476, 0.0
  %v611 = vmax.f32 %v479, 0.0
  %v612 = vmax.f32 %v484, 0.0
  %v613 = vmax.f32 %v487, 0.0
  %v614 = vmax.f32 %v492, 0.0
  %v615 = vmax.f32 %v495, 0.0
  %v616 = vmax.f32 %v500, 0.0
  %v617 = vmax.f32 %v503, 0.0
  %v618 = vmax.f32 %v508, 0.0
  %v619 = vmax.f32 %v511, 0.0
  %v620 = vmax.f32 %v516, 0.0
  %v621 = vmax.f32 %v519, 0.0
  %v622 = vmax.f32 %v524, 0.0
  %v623 = vmax.f32 %v527, 0.0
  %v624 = vmax.f32 %v532, 0.0
  %v625 = vmax.f32 %v535, 0.0
  %v626 = vmax.f32 %v540, 0.0
  %v627 = vmax.f32 %v543, 0.0
  %v628 = vmax.f32 %v548, 0.0
  %v629 = vmax.f32 %v551, 0.0
  %v630 = vmax.f32 %v556, 0.0
  %v631 = vmax.f32 %v559, 0.0
  %v632 = vmax.f32 %v564, 0.0
  %v633 = vmax.f32 %v567, 0.0
  %v634 = vpack.c.bf16 %v571, %v570
  %v635 = vpack.c.bf16 %v573, %v572
  %v636 = vpack.c.bf16 %v575, %v574
  %v637 = vpack.c.bf16 %v577, %v576
  %v638 = vpack.c.bf16 %v579, %v578
  %v639 = vpack.c.bf16 %v581, %v580
  %v640 = vpack.c.bf16 %v583, %v582
  %v641 = vpack.c.bf16 %v585, %v584
  %v642 = vpack.c.bf16 %v587, %v586
  %v643 = vpack.c.bf16 %v589, %v588
  %v644 = vpack.c.bf16 %v591, %v590
  %v645 = vpack.c.bf16 %v593, %v592
  %v646 = vpack.c.bf16 %v595, %v594
  %v647 = vpack.c.bf16 %v597, %v596
  %v648 = vpack.c.bf16 %v599, %v598
  %v649 = vpack.c.bf16 %v601, %v600
  %v650 = vpack.c.bf16 %v603, %v602
  %v651 = vpack.c.bf16 %v605, %v604
  %v652 = vpack.c.bf16 %v607, %v606
  %v653 = vpack.c.bf16 %v609, %v608
  %v654 = vpack.c.bf16 %v611, %v610
  %v655 = vpack.c.bf16 %v613, %v612
  %v656 = vpack.c.bf16 %v615, %v614
  %v657 = vpack.c.bf16 %v617, %v616
  %v658 = vpack.c.bf16 %v619, %v618
  %v659 = vpack.c.bf16 %v621, %v620
  %v660 = vpack.c.bf16 %v623, %v622
  %v661 = vpack.c.bf16 %v625, %v624
  %v662 = vpack.c.bf16 %v627, %v626
  %v663 = vpack.c.bf16 %v629, %v628
  %v664 = vpack.c.bf16 %v631, %v630
  %v665 = vpack.c.bf16 %v633, %v632
  %v666 = vld [vmem:[%s3] sm:$0xf]
  %v667 = vld [vmem:[%s3 + $0x4] sm:$0xf]
  %v668 = vld [vmem:[%s3 + $0x8] sm:$0xf]
  %v669 = vld [vmem:[%s3 + $0xc] sm:$0xf]
  %v670 = vld [vmem:[%s3 + $0x10] sm:$0xf]
  %v671 = vld [vmem:[%s3 + $0x14] sm:$0xf]
  %v672 = vld [vmem:[%s3 + $0x18] sm:$0xf]
  %v673 = vld [vmem:[%s3 + $0x1c] sm:$0xf]
  %v674 = vld [vmem:[%s3 + $0x20] sm:$0xf]
  %v675 = vld [vmem:[%s3 + $0x24] sm:$0xf]
  %v676 = vld [vmem:[%s3 + $0x28] sm:$0xf]
  %v677 = vld [vmem:[%s3 + $0x2c] sm:$0xf]
  %v678 = vld [vmem:[%s3 + $0x30] sm:$0xf]
  %v679 = vld [vmem:[%s3 + $0x34] sm:$0xf]
  %v680 = vld [vmem:[%s3 + $0x38] sm:$0xf]
  %v681 = vld [vmem:[%s3 + $0x3c] sm:$0xf]
  %v682 = vld [vmem:[%s4] sm:$0x1]
  %v684 = vlaneseq
  %v685 = vshrl.u32 %v684, 7
  %v686 = vsub.s32 0, %v685
  %v687 = vrot.slane %v682, %v686
  %v705 = vunpack.c.l.b16 %v666
  %v706 = vunpack.c.l.b16 %v667
  %v707 = vunpack.c.l.b16 %v668
  %v708 = vunpack.c.l.b16 %v669
  %v709 = vunpack.c.l.b16 %v670
  %v710 = vunpack.c.l.b16 %v671
  %v711 = vunpack.c.l.b16 %v672
  %v712 = vunpack.c.l.b16 %v673
  %v713 = vunpack.c.l.b16 %v674
  %v714 = vunpack.c.l.b16 %v675
  %v715 = vunpack.c.l.b16 %v676
  %v716 = vunpack.c.l.b16 %v677
  %v717 = vunpack.c.l.b16 %v678
  %v718 = vunpack.c.l.b16 %v679
  %v719 = vunpack.c.l.b16 %v680
  %v720 = vunpack.c.l.b16 %v681
  %v721 = vpack.c.b16 %v706, %v705
  %v722 = vpack.c.b16 %v708, %v707
  %v723 = vpack.c.b16 %v710, %v709
  %v724 = vpack.c.b16 %v712, %v711
  %v725 = vpack.c.b16 %v714, %v713
  %v726 = vpack.c.b16 %v716, %v715
  %v727 = vpack.c.b16 %v718, %v717
  %v728 = vpack.c.b16 %v720, %v719
  %737 = vmatprep.subr.bf16.mxu0 0
  %738 = vmatpush1.bf16.msra.mxu0 %v721
  %739 = vmatprep.subr.bf16.mxu0 0
  %740 = vmatpush1.bf16.msra.mxu0 %v722
  %741 = vmatprep.subr.bf16.mxu0 0
  %742 = vmatpush1.bf16.msra.mxu0 %v723
  %743 = vmatprep.subr.bf16.mxu0 0
  %744 = vmatpush1.bf16.msra.mxu0 %v724
  %745 = vmatprep.subr.bf16.mxu0 0
  %746 = vmatpush1.bf16.msra.mxu0 %v725
  %747 = vmatprep.subr.bf16.mxu0 0
  %748 = vmatpush1.bf16.msra.mxu0 %v726
  %749 = vmatprep.subr.bf16.mxu0 0
  %750 = vmatpush1.bf16.msra.mxu0 %v727
  %751 = vmatprep.subr.bf16.mxu0 0
  %752 = vmatpush1.bf16.msra.mxu0 %v728
  %753 = vmatprep.subr.bf16.mxu0 0
  %754 = vmatpush1.bf16.msra.mxu0 0
  %755 = vmatprep.subr.bf16.mxu0 0
  %756 = vmatpush1.bf16.msra.mxu0 0
  %757 = vmatprep.subr.bf16.mxu0 0
  %758 = vmatpush1.bf16.msra.mxu0 0
  %759 = vmatprep.subr.bf16.mxu0 0
  %760 = vmatpush1.bf16.msra.mxu0 0
  %761 = vmatprep.subr.bf16.mxu0 0
  %762 = vmatpush1.bf16.msra.mxu0 0
  %763 = vmatprep.subr.bf16.mxu0 0
  %764 = vmatpush1.bf16.msra.mxu0 0
  %765 = vmatprep.subr.bf16.mxu0 0
  %766 = vmatpush1.bf16.msra.mxu0 0
  %767 = vmatprep.subr.bf16.mxu0 0
  %768 = vmatpush1.bf16.msra.mxu0 0
  %769 = vmatprep.mubr.bf16.mxu0 0
  %770 = vmatmul.mubr.bf16.gmra.mrb[0].mxu0 %v634
  %v771 = vpop.f32.mrb[0].mxu0
  %v772 = vadd.f32 %v687, %v771
  %v773 = vpop.f32.mrb[0].mxu0
  %v774 = vpop.f32.mrb[0].mxu0
  %v775 = vadd.f32 %v687, %v774
  %v776 = vpop.f32.mrb[0].mxu0
  %777 = vmatprep.mubr.bf16.mxu0 0
  %778 = vmatmul.mubr.bf16.gmra.mrb[0].mxu0 %v635
  %v779 = vpop.f32.mrb[0].mxu0
  %v780 = vadd.f32 %v687, %v779
  %v781 = vpop.f32.mrb[0].mxu0
  %v782 = vpop.f32.mrb[0].mxu0
  %v783 = vadd.f32 %v687, %v782
  %v784 = vpop.f32.mrb[0].mxu0
  %785 = vmatprep.mubr.bf16.mxu0 0
  %786 = vmatmul.mubr.bf16.gmra.mrb[0].mxu0 %v636
  %v787 = vpop.f32.mrb[0].mxu0
  %v788 = vadd.f32 %v687, %v787
  %v789 = vpop.f32.mrb[0].mxu0
  %v790 = vpop.f32.mrb[0].mxu0
  %v791 = vadd.f32 %v687, %v790
  %v792 = vpop.f32.mrb[0].mxu0
  %793 = vmatprep.mubr.bf16.mxu0 0
  %794 = vmatmul.mubr.bf16.gmra.mrb[0].mxu0 %v637
  %v795 = vpop.f32.mrb[0].mxu0
  %v796 = vadd.f32 %v687, %v795
  %v797 = vpop.f32.mrb[0].mxu0
  %v798 = vpop.f32.mrb[0].mxu0
  %v799 = vadd.f32 %v687, %v798
  %v800 = vpop.f32.mrb[0].mxu0
  %801 = vmatprep.mubr.bf16.mxu0 0
  %802 = vmatmul.mubr.bf16.gmra.mrb[0].mxu0 %v638
  %v803 = vpop.f32.mrb[0].mxu0
  %v804 = vadd.f32 %v687, %v803
  %v805 = vpop.f32.mrb[0].mxu0
  %v806 = vpop.f32.mrb[0].mxu0
  %v807 = vadd.f32 %v687, %v806
  %v808 = vpop.f32.mrb[0].mxu0
  %809 = vmatprep.mubr.bf16.mxu0 0
  %810 = vmatmul.mubr.bf16.gmra.mrb[0].mxu0 %v639
  %v811 = vpop.f32.mrb[0].mxu0
  %v812 = vadd.f32 %v687, %v811
  %v813 = vpop.f32.mrb[0].mxu0
  %v814 = vpop.f32.mrb[0].mxu0
  %v815 = vadd.f32 %v687, %v814
  %v816 = vpop.f32.mrb[0].mxu0
  %817 = vmatprep.mubr.bf16.mxu0 0
  %818 = vmatmul.mubr.bf16.gmra.mrb[0].mxu0 %v640
  %v819 = vpop.f32.mrb[0].mxu0
  %v820 = vadd.f32 %v687, %v819
  %v821 = vpop.f32.mrb[0].mxu0
  %v822 = vpop.f32.mrb[0].mxu0
  %v823 = vadd.f32 %v687, %v822
  %v824 = vpop.f32.mrb[0].mxu0
  %825 = vmatprep.mubr.bf16.mxu0 0
  %826 = vmatmul.mubr.bf16.gmra.mrb[0].mxu0 %v641
  %v827 = vpop.f32.mrb[0].mxu0
  %v828 = vadd.f32 %v687, %v827
  %v829 = vpop.f32.mrb[0].mxu0
  %v830 = vpop.f32.mrb[0].mxu0
  %v831 = vadd.f32 %v687, %v830
  %v832 = vpop.f32.mrb[0].mxu0
  %833 = vmatprep.mubr.bf16.mxu0 0
  %834 = vmatmul.mubr.bf16.gmra.mrb[0].mxu0 %v642
  %v835 = vpop.f32.mrb[0].mxu0
  %v836 = vadd.f32 %v687, %v835
  %v837 = vpop.f32.mrb[0].mxu0
  %v838 = vpop.f32.mrb[0].mxu0
  %v839 = vadd.f32 %v687, %v838
  %v840 = vpop.f32.mrb[0].mxu0
  %841 = vmatprep.mubr.bf16.mxu0 0
  %842 = vmatmul.mubr.bf16.gmra.mrb[0].mxu0 %v643
  %v843 = vpop.f32.mrb[0].mxu0
  %v844 = vadd.f32 %v687, %v843
  %v845 = vpop.f32.mrb[0].mxu0
  %v846 = vpop.f32.mrb[0].mxu0
  %v847 = vadd.f32 %v687, %v846
  %v848 = vpop.f32.mrb[0].mxu0
  %849 = vmatprep.mubr.bf16.mxu0 0
  %850 = vmatmul.mubr.bf16.gmra.mrb[0].mxu0 %v644
  %v851 = vpop.f32.mrb[0].mxu0
  %v852 = vadd.f32 %v687, %v851
  %v853 = vpop.f32.mrb[0].mxu0
  %v854 = vpop.f32.mrb[0].mxu0
  %v855 = vadd.f32 %v687, %v854
  %v856 = vpop.f32.mrb[0].mxu0
  %857 = vmatprep.mubr.bf16.mxu0 0
  %858 = vmatmul.mubr.bf16.gmra.mrb[0].mxu0 %v645
  %v859 = vpop.f32.mrb[0].mxu0
  %v860 = vadd.f32 %v687, %v859
  %v861 = vpop.f32.mrb[0].mxu0
  %v862 = vpop.f32.mrb[0].mxu0
  %v863 = vadd.f32 %v687, %v862
  %v864 = vpop.f32.mrb[0].mxu0
  %865 = vmatprep.mubr.bf16.mxu0 0
  %866 = vmatmul.mubr.bf16.gmra.mrb[0].mxu0 %v646
  %v867 = vpop.f32.mrb[0].mxu0
  %v868 = vadd.f32 %v687, %v867
  %v869 = vpop.f32.mrb[0].mxu0
  %v870 = vpop.f32.mrb[0].mxu0
  %v871 = vadd.f32 %v687, %v870
  %v872 = vpop.f32.mrb[0].mxu0
  %873 = vmatprep.mubr.bf16.mxu0 0
  %874 = vmatmul.mubr.bf16.gmra.mrb[0].mxu0 %v647
  %v875 = vpop.f32.mrb[0].mxu0
  %v876 = vadd.f32 %v687, %v875
  %v877 = vpop.f32.mrb[0].mxu0
  %v878 = vpop.f32.mrb[0].mxu0
  %v879 = vadd.f32 %v687, %v878
  %v880 = vpop.f32.mrb[0].mxu0
  %881 = vmatprep.mubr.bf16.mxu0 0
  %882 = vmatmul.mubr.bf16.gmra.mrb[0].mxu0 %v648
  %v883 = vpop.f32.mrb[0].mxu0
  %v884 = vadd.f32 %v687, %v883
  %v885 = vpop.f32.mrb[0].mxu0
  %v886 = vpop.f32.mrb[0].mxu0
  %v887 = vadd.f32 %v687, %v886
  %v888 = vpop.f32.mrb[0].mxu0
  %889 = vmatprep.mubr.bf16.mxu0 0
  %890 = vmatmul.mubr.bf16.gmra.mrb[0].mxu0 %v649
  %v891 = vpop.f32.mrb[0].mxu0
  %v892 = vadd.f32 %v687, %v891
  %v893 = vpop.f32.mrb[0].mxu0
  %v894 = vpop.f32.mrb[0].mxu0
  %v895 = vadd.f32 %v687, %v894
  %v896 = vpop.f32.mrb[0].mxu0
  %897 = vmatprep.mubr.bf16.mxu0 0
  %898 = vmatmul.mubr.bf16.gmra.mrb[0].mxu0 %v650
  %v899 = vpop.f32.mrb[0].mxu0
  %v900 = vadd.f32 %v687, %v899
  %v901 = vpop.f32.mrb[0].mxu0
  %v902 = vpop.f32.mrb[0].mxu0
  %v903 = vadd.f32 %v687, %v902
  %v904 = vpop.f32.mrb[0].mxu0
  %905 = vmatprep.mubr.bf16.mxu0 0
  %906 = vmatmul.mubr.bf16.gmra.mrb[0].mxu0 %v651
  %v907 = vpop.f32.mrb[0].mxu0
  %v908 = vadd.f32 %v687, %v907
  %v909 = vpop.f32.mrb[0].mxu0
  %v910 = vpop.f32.mrb[0].mxu0
  %v911 = vadd.f32 %v687, %v910
  %v912 = vpop.f32.mrb[0].mxu0
  %913 = vmatprep.mubr.bf16.mxu0 0
  %914 = vmatmul.mubr.bf16.gmra.mrb[0].mxu0 %v652
  %v915 = vpop.f32.mrb[0].mxu0
  %v916 = vadd.f32 %v687, %v915
  %v917 = vpop.f32.mrb[0].mxu0
  %v918 = vpop.f32.mrb[0].mxu0
  %v919 = vadd.f32 %v687, %v918
  %v920 = vpop.f32.mrb[0].mxu0
  %921 = vmatprep.mubr.bf16.mxu0 0
  %922 = vmatmul.mubr.bf16.gmra.mrb[0].mxu0 %v653
  %v923 = vpop.f32.mrb[0].mxu0
  %v924 = vadd.f32 %v687, %v923
  %v925 = vpop.f32.mrb[0].mxu0
  %v926 = vpop.f32.mrb[0].mxu0
  %v927 = vadd.f32 %v687, %v926
  %v928 = vpop.f32.mrb[0].mxu0
  %929 = vmatprep.mubr.bf16.mxu0 0
  %930 = vmatmul.mubr.bf16.gmra.mrb[0].mxu0 %v654
  %v931 = vpop.f32.mrb[0].mxu0
  %v932 = vadd.f32 %v687, %v931
  %v933 = vpop.f32.mrb[0].mxu0
  %v934 = vpop.f32.mrb[0].mxu0
  %v935 = vadd.f32 %v687, %v934
  %v936 = vpop.f32.mrb[0].mxu0
  %937 = vmatprep.mubr.bf16.mxu0 0
  %938 = vmatmul.mubr.bf16.gmra.mrb[0].mxu0 %v655
  %v939 = vpop.f32.mrb[0].mxu0
  %v940 = vadd.f32 %v687, %v939
  %v941 = vpop.f32.mrb[0].mxu0
  %v942 = vpop.f32.mrb[0].mxu0
  %v943 = vadd.f32 %v687, %v942
  %v944 = vpop.f32.mrb[0].mxu0
  %945 = vmatprep.mubr.bf16.mxu0 0
  %946 = vmatmul.mubr.bf16.gmra.mrb[0].mxu0 %v656
  %v947 = vpop.f32.mrb[0].mxu0
  %v948 = vadd.f32 %v687, %v947
  %v949 = vpop.f32.mrb[0].mxu0
  %v950 = vpop.f32.mrb[0].mxu0
  %v951 = vadd.f32 %v687, %v950
  %v952 = vpop.f32.mrb[0].mxu0
  %953 = vmatprep.mubr.bf16.mxu0 0
  %954 = vmatmul.mubr.bf16.gmra.mrb[0].mxu0 %v657
  %v955 = vpop.f32.mrb[0].mxu0
  %v956 = vadd.f32 %v687, %v955
  %v957 = vpop.f32.mrb[0].mxu0
  %v958 = vpop.f32.mrb[0].mxu0
  %v959 = vadd.f32 %v687, %v958
  %v960 = vpop.f32.mrb[0].mxu0
  %961 = vmatprep.mubr.bf16.mxu0 0
  %962 = vmatmul.mubr.bf16.gmra.mrb[0].mxu0 %v658
  %v963 = vpop.f32.mrb[0].mxu0
  %v964 = vadd.f32 %v687, %v963
  %v965 = vpop.f32.mrb[0].mxu0
  %v966 = vpop.f32.mrb[0].mxu0
  %v967 = vadd.f32 %v687, %v966
  %v968 = vpop.f32.mrb[0].mxu0
  %969 = vmatprep.mubr.bf16.mxu0 0
  %970 = vmatmul.mubr.bf16.gmra.mrb[0].mxu0 %v659
  %v971 = vpop.f32.mrb[0].mxu0
  %v972 = vadd.f32 %v687, %v971
  %v973 = vpop.f32.mrb[0].mxu0
  %v974 = vpop.f32.mrb[0].mxu0
  %v975 = vadd.f32 %v687, %v974
  %v976 = vpop.f32.mrb[0].mxu0
  %977 = vmatprep.mubr.bf16.mxu0 0
  %978 = vmatmul.mubr.bf16.gmra.mrb[0].mxu0 %v660
  %v979 = vpop.f32.mrb[0].mxu0
  %v980 = vadd.f32 %v687, %v979
  %v981 = vpop.f32.mrb[0].mxu0
  %v982 = vpop.f32.mrb[0].mxu0
  %v983 = vadd.f32 %v687, %v982
  %v984 = vpop.f32.mrb[0].mxu0
  %985 = vmatprep.mubr.bf16.mxu0 0
  %986 = vmatmul.mubr.bf16.gmra.mrb[0].mxu0 %v661
  %v987 = vpop.f32.mrb[0].mxu0
  %v988 = vadd.f32 %v687, %v987
  %v989 = vpop.f32.mrb[0].mxu0
  %v990 = vpop.f32.mrb[0].mxu0
  %v991 = vadd.f32 %v687, %v990
  %v992 = vpop.f32.mrb[0].mxu0
  %993 = vmatprep.mubr.bf16.mxu0 0
  %994 = vmatmul.mubr.bf16.gmra.mrb[0].mxu0 %v662
  %v995 = vpop.f32.mrb[0].mxu0
  %v996 = vadd.f32 %v687, %v995
  %v997 = vpop.f32.mrb[0].mxu0
  %v998 = vpop.f32.mrb[0].mxu0
  %v999 = vadd.f32 %v687, %v998
  %v1000 = vpop.f32.mrb[0].mxu0
  %1001 = vmatprep.mubr.bf16.mxu0 0
  %1002 = vmatmul.mubr.bf16.gmra.mrb[0].mxu0 %v663
  %v1003 = vpop.f32.mrb[0].mxu0
  %v1004 = vadd.f32 %v687, %v1003
  %v1005 = vpop.f32.mrb[0].mxu0
  %v1006 = vpop.f32.mrb[0].mxu0
  %v1007 = vadd.f32 %v687, %v1006
  %v1008 = vpop.f32.mrb[0].mxu0
  %1009 = vmatprep.mubr.bf16.mxu0 0
  %1010 = vmatmul.mubr.bf16.gmra.mrb[0].mxu0 %v664
  %v1011 = vpop.f32.mrb[0].mxu0
  %v1012 = vadd.f32 %v687, %v1011
  %v1013 = vpop.f32.mrb[0].mxu0
  %v1014 = vpop.f32.mrb[0].mxu0
  %v1015 = vadd.f32 %v687, %v1014
  %v1016 = vpop.f32.mrb[0].mxu0
  %1017 = vmatprep.mubr.bf16.mxu0 0
  %1018 = vmatmul.mubr.bf16.gmra.mrb[0].mxu0 %v665
  %v1019 = vpop.f32.mrb[0].mxu0
  %v1020 = vadd.f32 %v687, %v1019
  %v1021 = vpop.f32.mrb[0].mxu0
  %v1022 = vpop.f32.mrb[0].mxu0
  %v1023 = vadd.f32 %v687, %v1022
  %v1024 = vpop.f32.mrb[0].mxu0
  %1025 = vdwg.mxu0
  %v1026 = vmax.f32 %v772, 0.0
  %v1027 = vmax.f32 %v775, 0.0
  %v1028 = vmax.f32 %v780, 0.0
  %v1029 = vmax.f32 %v783, 0.0
  %v1030 = vmax.f32 %v788, 0.0
  %v1031 = vmax.f32 %v791, 0.0
  %v1032 = vmax.f32 %v796, 0.0
  %v1033 = vmax.f32 %v799, 0.0
  %v1034 = vmax.f32 %v804, 0.0
  %v1035 = vmax.f32 %v807, 0.0
  %v1036 = vmax.f32 %v812, 0.0
  %v1037 = vmax.f32 %v815, 0.0
  %v1038 = vmax.f32 %v820, 0.0
  %v1039 = vmax.f32 %v823, 0.0
  %v1040 = vmax.f32 %v828, 0.0
  %v1041 = vmax.f32 %v831, 0.0
  %v1042 = vmax.f32 %v836, 0.0
  %v1043 = vmax.f32 %v839, 0.0
  %v1044 = vmax.f32 %v844, 0.0
  %v1045 = vmax.f32 %v847, 0.0
  %v1046 = vmax.f32 %v852, 0.0
  %v1047 = vmax.f32 %v855, 0.0
  %v1048 = vmax.f32 %v860, 0.0
  %v1049 = vmax.f32 %v863, 0.0
  %v1050 = vmax.f32 %v868, 0.0
  %v1051 = vmax.f32 %v871, 0.0
  %v1052 = vmax.f32 %v876, 0.0
  %v1053 = vmax.f32 %v879, 0.0
  %v1054 = vmax.f32 %v884, 0.0
  %v1055 = vmax.f32 %v887, 0.0
  %v1056 = vmax.f32 %v892, 0.0
  %v1057 = vmax.f32 %v895, 0.0
  %v1058 = vmax.f32 %v900, 0.0
  %v1059 = vmax.f32 %v903, 0.0
  %v1060 = vmax.f32 %v908, 0.0
  %v1061 = vmax.f32 %v911, 0.0
  %v1062 = vmax.f32 %v916, 0.0
  %v1063 = vmax.f32 %v919, 0.0
  %v1064 = vmax.f32 %v924, 0.0
  %v1065 = vmax.f32 %v927, 0.0
  %v1066 = vmax.f32 %v932, 0.0
  %v1067 = vmax.f32 %v935, 0.0
  %v1068 = vmax.f32 %v940, 0.0
  %v1069 = vmax.f32 %v943, 0.0
  %v1070 = vmax.f32 %v948, 0.0
  %v1071 = vmax.f32 %v951, 0.0
  %v1072 = vmax.f32 %v956, 0.0
  %v1073 = vmax.f32 %v959, 0.0
  %v1074 = vmax.f32 %v964, 0.0
  %v1075 = vmax.f32 %v967, 0.0
  %v1076 = vmax.f32 %v972, 0.0
  %v1077 = vmax.f32 %v975, 0.0
  %v1078 = vmax.f32 %v980, 0.0
  %v1079 = vmax.f32 %v983, 0.0
  %v1080 = vmax.f32 %v988, 0.0
  %v1081 = vmax.f32 %v991, 0.0
  %v1082 = vmax.f32 %v996, 0.0
  %v1083 = vmax.f32 %v999, 0.0
  %v1084 = vmax.f32 %v1004, 0.0
  %v1085 = vmax.f32 %v1007, 0.0
  %v1086 = vmax.f32 %v1012, 0.0
  %v1087 = vmax.f32 %v1015, 0.0
  %v1088 = vmax.f32 %v1020, 0.0
  %v1089 = vmax.f32 %v1023, 0.0
  %v1090 = vpack.c.bf16 %v1027, %v1026
  %v1091 = vpack.c.bf16 %v1029, %v1028
  %v1092 = vpack.c.bf16 %v1031, %v1030
  %v1093 = vpack.c.bf16 %v1033, %v1032
  %v1094 = vpack.c.bf16 %v1035, %v1034
  %v1095 = vpack.c.bf16 %v1037, %v1036
  %v1096 = vpack.c.bf16 %v1039, %v1038
  %v1097 = vpack.c.bf16 %v1041, %v1040
  %v1098 = vpack.c.bf16 %v1043, %v1042
  %v1099 = vpack.c.bf16 %v1045, %v1044
  %v1100 = vpack.c.bf16 %v1047, %v1046
  %v1101 = vpack.c.bf16 %v1049, %v1048
  %v1102 = vpack.c.bf16 %v1051, %v1050
  %v1103 = vpack.c.bf16 %v1053, %v1052
  %v1104 = vpack.c.bf16 %v1055, %v1054
  %v1105 = vpack.c.bf16 %v1057, %v1056
  %v1106 = vpack.c.bf16 %v1059, %v1058
  %v1107 = vpack.c.bf16 %v1061, %v1060
  %v1108 = vpack.c.bf16 %v1063, %v1062
  %v1109 = vpack.c.bf16 %v1065, %v1064
  %v1110 = vpack.c.bf16 %v1067, %v1066
  %v1111 = vpack.c.bf16 %v1069, %v1068
  %v1112 = vpack.c.bf16 %v1071, %v1070
  %v1113 = vpack.c.bf16 %v1073, %v1072
  %v1114 = vpack.c.bf16 %v1075, %v1074
  %v1115 = vpack.c.bf16 %v1077, %v1076
  %v1116 = vpack.c.bf16 %v1079, %v1078
  %v1117 = vpack.c.bf16 %v1081, %v1080
  %v1118 = vpack.c.bf16 %v1083, %v1082
  %v1119 = vpack.c.bf16 %v1085, %v1084
  %v1120 = vpack.c.bf16 %v1087, %v1086
  %v1121 = vpack.c.bf16 %v1089, %v1088
  %v1122 = vld [vmem:[%s5] sm:$0xf]
  %v1123 = vld [vmem:[%s5 + $0x4] sm:$0xf]
  %v1124 = vld [vmem:[%s5 + $0x8] sm:$0xf]
  %v1125 = vld [vmem:[%s5 + $0xc] sm:$0xf]
  %v1126 = vld [vmem:[%s5 + $0x10] sm:$0xf]
  %v1127 = vld [vmem:[%s5 + $0x14] sm:$0xf]
  %v1128 = vld [vmem:[%s5 + $0x18] sm:$0xf]
  %v1129 = vld [vmem:[%s5 + $0x1c] sm:$0xf]
  %v1130 = vld [vmem:[%s5 + $0x20] sm:$0xf]
  %v1131 = vld [vmem:[%s5 + $0x24] sm:$0xf]
  %v1132 = vld [vmem:[%s5 + $0x28] sm:$0xf]
  %v1133 = vld [vmem:[%s5 + $0x2c] sm:$0xf]
  %v1134 = vld [vmem:[%s5 + $0x30] sm:$0xf]
  %v1135 = vld [vmem:[%s5 + $0x34] sm:$0xf]
  %v1136 = vld [vmem:[%s5 + $0x38] sm:$0xf]
  %v1137 = vld [vmem:[%s5 + $0x3c] sm:$0xf]
  %v1138 = vld [vmem:[%s6] sm:$0x1]
  %v1140 = vlaneseq
  %v1141 = vshrl.u32 %v1140, 7
  %v1142 = vsub.s32 0, %v1141
  %v1143 = vrot.slane %v1138, %v1142
  %v1161 = vunpack.c.l.b16 %v1122
  %v1162 = vunpack.c.l.b16 %v1123
  %v1163 = vunpack.c.l.b16 %v1124
  %v1164 = vunpack.c.l.b16 %v1125
  %v1165 = vunpack.c.l.b16 %v1126
  %v1166 = vunpack.c.l.b16 %v1127
  %v1167 = vunpack.c.l.b16 %v1128
  %v1168 = vunpack.c.l.b16 %v1129
  %v1169 = vunpack.c.l.b16 %v1130
  %v1170 = vunpack.c.l.b16 %v1131
  %v1171 = vunpack.c.l.b16 %v1132
  %v1172 = vunpack.c.l.b16 %v1133
  %v1173 = vunpack.c.l.b16 %v1134
  %v1174 = vunpack.c.l.b16 %v1135
  %v1175 = vunpack.c.l.b16 %v1136
  %v1176 = vunpack.c.l.b16 %v1137
  %v1177 = vpack.c.b16 %v1162, %v1161
  %v1178 = vpack.c.b16 %v1164, %v1163
  %v1179 = vpack.c.b16 %v1166, %v1165
  %v1180 = vpack.c.b16 %v1168, %v1167
  %v1181 = vpack.c.b16 %v1170, %v1169
  %v1182 = vpack.c.b16 %v1172, %v1171
  %v1183 = vpack.c.b16 %v1174, %v1173
  %v1184 = vpack.c.b16 %v1176, %v1175
  %1193 = vmatprep.subr.bf16.mxu0 0
  %1194 = vmatpush1.bf16.msra.mxu0 %v1177
  %1195 = vmatprep.subr.bf16.mxu0 0
  %1196 = vmatpush1.bf16.msra.mxu0 %v1178
  %1197 = vmatprep.subr.bf16.mxu0 0
  %1198 = vmatpush1.bf16.msra.mxu0 %v1179
  %1199 = vmatprep.subr.bf16.mxu0 0
  %1200 = vmatpush1.bf16.msra.mxu0 %v1180
  %1201 = vmatprep.subr.bf16.mxu0 0
  %1202 = vmatpush1.bf16.msra.mxu0 %v1181
  %1203 = vmatprep.subr.bf16.mxu0 0
  %1204 = vmatpush1.bf16.msra.mxu0 %v1182
  %1205 = vmatprep.subr.bf16.mxu0 0
  %1206 = vmatpush1.bf16.msra.mxu0 %v1183
  %1207 = vmatprep.subr.bf16.mxu0 0
  %1208 = vmatpush1.bf16.msra.mxu0 %v1184
  %1209 = vmatprep.subr.bf16.mxu0 0
  %1210 = vmatpush1.bf16.msra.mxu0 0
  %1211 = vmatprep.subr.bf16.mxu0 0
  %1212 = vmatpush1.bf16.msra.mxu0 0
  %1213 = vmatprep.subr.bf16.mxu0 0
  %1214 = vmatpush1.bf16.msra.mxu0 0
  %1215 = vmatprep.subr.bf16.mxu0 0
  %1216 = vmatpush1.bf16.msra.mxu0 0
  %1217 = vmatprep.subr.bf16.mxu0 0
  %1218 = vmatpush1.bf16.msra.mxu0 0
  %1219 = vmatprep.subr.bf16.mxu0 0
  %1220 = vmatpush1.bf16.msra.mxu0 0
  %1221 = vmatprep.subr.bf16.mxu0 0
  %1222 = vmatpush1.bf16.msra.mxu0 0
  %1223 = vmatprep.subr.bf16.mxu0 0
  %1224 = vmatpush1.bf16.msra.mxu0 0
  %1225 = vmatprep.mubr.bf16.mxu0 0
  %1226 = vmatmul.mubr.bf16.gmra.mrb[0].mxu0 %v1090
  %v1227 = vpop.f32.mrb[0].mxu0
  %v1228 = vadd.f32 %v1143, %v1227
  %v1229 = vpop.f32.mrb[0].mxu0
  %v1230 = vpop.f32.mrb[0].mxu0
  %v1231 = vadd.f32 %v1143, %v1230
  %v1232 = vpop.f32.mrb[0].mxu0
  %1233 = vmatprep.mubr.bf16.mxu0 0
  %1234 = vmatmul.mubr.bf16.gmra.mrb[0].mxu0 %v1091
  %v1235 = vpop.f32.mrb[0].mxu0
  %v1236 = vadd.f32 %v1143, %v1235
  %v1237 = vpop.f32.mrb[0].mxu0
  %v1238 = vpop.f32.mrb[0].mxu0
  %v1239 = vadd.f32 %v1143, %v1238
  %v1240 = vpop.f32.mrb[0].mxu0
  %1241 = vmatprep.mubr.bf16.mxu0 0
  %1242 = vmatmul.mubr.bf16.gmra.mrb[0].mxu0 %v1092
  %v1243 = vpop.f32.mrb[0].mxu0
  %v1244 = vadd.f32 %v1143, %v1243
  %v1245 = vpop.f32.mrb[0].mxu0
  %v1246 = vpop.f32.mrb[0].mxu0
  %v1247 = vadd.f32 %v1143, %v1246
  %v1248 = vpop.f32.mrb[0].mxu0
  %1249 = vmatprep.mubr.bf16.mxu0 0
  %1250 = vmatmul.mubr.bf16.gmra.mrb[0].mxu0 %v1093
  %v1251 = vpop.f32.mrb[0].mxu0
  %v1252 = vadd.f32 %v1143, %v1251
  %v1253 = vpop.f32.mrb[0].mxu0
  %v1254 = vpop.f32.mrb[0].mxu0
  %v1255 = vadd.f32 %v1143, %v1254
  %v1256 = vpop.f32.mrb[0].mxu0
  %1257 = vmatprep.mubr.bf16.mxu0 0
  %1258 = vmatmul.mubr.bf16.gmra.mrb[0].mxu0 %v1094
  %v1259 = vpop.f32.mrb[0].mxu0
  %v1260 = vadd.f32 %v1143, %v1259
  %v1261 = vpop.f32.mrb[0].mxu0
  %v1262 = vpop.f32.mrb[0].mxu0
  %v1263 = vadd.f32 %v1143, %v1262
  %v1264 = vpop.f32.mrb[0].mxu0
  %1265 = vmatprep.mubr.bf16.mxu0 0
  %1266 = vmatmul.mubr.bf16.gmra.mrb[0].mxu0 %v1095
  %v1267 = vpop.f32.mrb[0].mxu0
  %v1268 = vadd.f32 %v1143, %v1267
  %v1269 = vpop.f32.mrb[0].mxu0
  %v1270 = vpop.f32.mrb[0].mxu0
  %v1271 = vadd.f32 %v1143, %v1270
  %v1272 = vpop.f32.mrb[0].mxu0
  %1273 = vmatprep.mubr.bf16.mxu0 0
  %1274 = vmatmul.mubr.bf16.gmra.mrb[0].mxu0 %v1096
  %v1275 = vpop.f32.mrb[0].mxu0
  %v1276 = vadd.f32 %v1143, %v1275
  %v1277 = vpop.f32.mrb[0].mxu0
  %v1278 = vpop.f32.mrb[0].mxu0
  %v1279 = vadd.f32 %v1143, %v1278
  %v1280 = vpop.f32.mrb[0].mxu0
  %1281 = vmatprep.mubr.bf16.mxu0 0
  %1282 = vmatmul.mubr.bf16.gmra.mrb[0].mxu0 %v1097
  %v1283 = vpop.f32.mrb[0].mxu0
  %v1284 = vadd.f32 %v1143, %v1283
  %v1285 = vpop.f32.mrb[0].mxu0
  %v1286 = vpop.f32.mrb[0].mxu0
  %v1287 = vadd.f32 %v1143, %v1286
  %v1288 = vpop.f32.mrb[0].mxu0
  %1289 = vmatprep.mubr.bf16.mxu0 0
  %1290 = vmatmul.mubr.bf16.gmra.mrb[0].mxu0 %v1098
  %v1291 = vpop.f32.mrb[0].mxu0
  %v1292 = vadd.f32 %v1143, %v1291
  %v1293 = vpop.f32.mrb[0].mxu0
  %v1294 = vpop.f32.mrb[0].mxu0
  %v1295 = vadd.f32 %v1143, %v1294
  %v1296 = vpop.f32.mrb[0].mxu0
  %1297 = vmatprep.mubr.bf16.mxu0 0
  %1298 = vmatmul.mubr.bf16.gmra.mrb[0].mxu0 %v1099
  %v1299 = vpop.f32.mrb[0].mxu0
  %v1300 = vadd.f32 %v1143, %v1299
  %v1301 = vpop.f32.mrb[0].mxu0
  %v1302 = vpop.f32.mrb[0].mxu0
  %v1303 = vadd.f32 %v1143, %v1302
  %v1304 = vpop.f32.mrb[0].mxu0
  %1305 = vmatprep.mubr.bf16.mxu0 0
  %1306 = vmatmul.mubr.bf16.gmra.mrb[0].mxu0 %v1100
  %v1307 = vpop.f32.mrb[0].mxu0
  %v1308 = vadd.f32 %v1143, %v1307
  %v1309 = vpop.f32.mrb[0].mxu0
  %v1310 = vpop.f32.mrb[0].mxu0
  %v1311 = vadd.f32 %v1143, %v1310
  %v1312 = vpop.f32.mrb[0].mxu0
  %1313 = vmatprep.mubr.bf16.mxu0 0
  %1314 = vmatmul.mubr.bf16.gmra.mrb[0].mxu0 %v1101
  %v1315 = vpop.f32.mrb[0].mxu0
  %v1316 = vadd.f32 %v1143, %v1315
  %v1317 = vpop.f32.mrb[0].mxu0
  %v1318 = vpop.f32.mrb[0].mxu0
  %v1319 = vadd.f32 %v1143, %v1318
  %v1320 = vpop.f32.mrb[0].mxu0
  %1321 = vmatprep.mubr.bf16.mxu0 0
  %1322 = vmatmul.mubr.bf16.gmra.mrb[0].mxu0 %v1102
  %v1323 = vpop.f32.mrb[0].mxu0
  %v1324 = vadd.f32 %v1143, %v1323
  %v1325 = vpop.f32.mrb[0].mxu0
  %v1326 = vpop.f32.mrb[0].mxu0
  %v1327 = vadd.f32 %v1143, %v1326
  %v1328 = vpop.f32.mrb[0].mxu0
  %1329 = vmatprep.mubr.bf16.mxu0 0
  %1330 = vmatmul.mubr.bf16.gmra.mrb[0].mxu0 %v1103
  %v1331 = vpop.f32.mrb[0].mxu0
  %v1332 = vadd.f32 %v1143, %v1331
  %v1333 = vpop.f32.mrb[0].mxu0
  %v1334 = vpop.f32.mrb[0].mxu0
  %v1335 = vadd.f32 %v1143, %v1334
  %v1336 = vpop.f32.mrb[0].mxu0
  %1337 = vmatprep.mubr.bf16.mxu0 0
  %1338 = vmatmul.mubr.bf16.gmra.mrb[0].mxu0 %v1104
  %v1339 = vpop.f32.mrb[0].mxu0
  %v1340 = vadd.f32 %v1143, %v1339
  %v1341 = vpop.f32.mrb[0].mxu0
  %v1342 = vpop.f32.mrb[0].mxu0
  %v1343 = vadd.f32 %v1143, %v1342
  %v1344 = vpop.f32.mrb[0].mxu0
  %1345 = vmatprep.mubr.bf16.mxu0 0
  %1346 = vmatmul.mubr.bf16.gmra.mrb[0].mxu0 %v1105
  %v1347 = vpop.f32.mrb[0].mxu0
  %v1348 = vadd.f32 %v1143, %v1347
  %v1349 = vpop.f32.mrb[0].mxu0
  %v1350 = vpop.f32.mrb[0].mxu0
  %v1351 = vadd.f32 %v1143, %v1350
  %v1352 = vpop.f32.mrb[0].mxu0
  %1353 = vmatprep.mubr.bf16.mxu0 0
  %1354 = vmatmul.mubr.bf16.gmra.mrb[0].mxu0 %v1106
  %v1355 = vpop.f32.mrb[0].mxu0
  %v1356 = vadd.f32 %v1143, %v1355
  %v1357 = vpop.f32.mrb[0].mxu0
  %v1358 = vpop.f32.mrb[0].mxu0
  %v1359 = vadd.f32 %v1143, %v1358
  %v1360 = vpop.f32.mrb[0].mxu0
  %1361 = vmatprep.mubr.bf16.mxu0 0
  %1362 = vmatmul.mubr.bf16.gmra.mrb[0].mxu0 %v1107
  %v1363 = vpop.f32.mrb[0].mxu0
  %v1364 = vadd.f32 %v1143, %v1363
  %v1365 = vpop.f32.mrb[0].mxu0
  %v1366 = vpop.f32.mrb[0].mxu0
  %v1367 = vadd.f32 %v1143, %v1366
  %v1368 = vpop.f32.mrb[0].mxu0
  %1369 = vmatprep.mubr.bf16.mxu0 0
  %1370 = vmatmul.mubr.bf16.gmra.mrb[0].mxu0 %v1108
  %v1371 = vpop.f32.mrb[0].mxu0
  %v1372 = vadd.f32 %v1143, %v1371
  %v1373 = vpop.f32.mrb[0].mxu0
  %v1374 = vpop.f32.mrb[0].mxu0
  %v1375 = vadd.f32 %v1143, %v1374
  %v1376 = vpop.f32.mrb[0].mxu0
  %1377 = vmatprep.mubr.bf16.mxu0 0
  %1378 = vmatmul.mubr.bf16.gmra.mrb[0].mxu0 %v1109
  %v1379 = vpop.f32.mrb[0].mxu0
  %v1380 = vadd.f32 %v1143, %v1379
  %v1381 = vpop.f32.mrb[0].mxu0
  %v1382 = vpop.f32.mrb[0].mxu0
  %v1383 = vadd.f32 %v1143, %v1382
  %v1384 = vpop.f32.mrb[0].mxu0
  %1385 = vmatprep.mubr.bf16.mxu0 0
  %1386 = vmatmul.mubr.bf16.gmra.mrb[0].mxu0 %v1110
  %v1387 = vpop.f32.mrb[0].mxu0
  %v1388 = vadd.f32 %v1143, %v1387
  %v1389 = vpop.f32.mrb[0].mxu0
  %v1390 = vpop.f32.mrb[0].mxu0
  %v1391 = vadd.f32 %v1143, %v1390
  %v1392 = vpop.f32.mrb[0].mxu0
  %1393 = vmatprep.mubr.bf16.mxu0 0
  %1394 = vmatmul.mubr.bf16.gmra.mrb[0].mxu0 %v1111
  %v1395 = vpop.f32.mrb[0].mxu0
  %v1396 = vadd.f32 %v1143, %v1395
  %v1397 = vpop.f32.mrb[0].mxu0
  %v1398 = vpop.f32.mrb[0].mxu0
  %v1399 = vadd.f32 %v1143, %v1398
  %v1400 = vpop.f32.mrb[0].mxu0
  %1401 = vmatprep.mubr.bf16.mxu0 0
  %1402 = vmatmul.mubr.bf16.gmra.mrb[0].mxu0 %v1112
  %v1403 = vpop.f32.mrb[0].mxu0
  %v1404 = vadd.f32 %v1143, %v1403
  %v1405 = vpop.f32.mrb[0].mxu0
  %v1406 = vpop.f32.mrb[0].mxu0
  %v1407 = vadd.f32 %v1143, %v1406
  %v1408 = vpop.f32.mrb[0].mxu0
  %1409 = vmatprep.mubr.bf16.mxu0 0
  %1410 = vmatmul.mubr.bf16.gmra.mrb[0].mxu0 %v1113
  %v1411 = vpop.f32.mrb[0].mxu0
  %v1412 = vadd.f32 %v1143, %v1411
  %v1413 = vpop.f32.mrb[0].mxu0
  %v1414 = vpop.f32.mrb[0].mxu0
  %v1415 = vadd.f32 %v1143, %v1414
  %v1416 = vpop.f32.mrb[0].mxu0
  %1417 = vmatprep.mubr.bf16.mxu0 0
  %1418 = vmatmul.mubr.bf16.gmra.mrb[0].mxu0 %v1114
  %v1419 = vpop.f32.mrb[0].mxu0
  %v1420 = vadd.f32 %v1143, %v1419
  %v1421 = vpop.f32.mrb[0].mxu0
  %v1422 = vpop.f32.mrb[0].mxu0
  %v1423 = vadd.f32 %v1143, %v1422
  %v1424 = vpop.f32.mrb[0].mxu0
  %1425 = vmatprep.mubr.bf16.mxu0 0
  %1426 = vmatmul.mubr.bf16.gmra.mrb[0].mxu0 %v1115
  %v1427 = vpop.f32.mrb[0].mxu0
  %v1428 = vadd.f32 %v1143, %v1427
  %v1429 = vpop.f32.mrb[0].mxu0
  %v1430 = vpop.f32.mrb[0].mxu0
  %v1431 = vadd.f32 %v1143, %v1430
  %v1432 = vpop.f32.mrb[0].mxu0
  %1433 = vmatprep.mubr.bf16.mxu0 0
  %1434 = vmatmul.mubr.bf16.gmra.mrb[0].mxu0 %v1116
  %v1435 = vpop.f32.mrb[0].mxu0
  %v1436 = vadd.f32 %v1143, %v1435
  %v1437 = vpop.f32.mrb[0].mxu0
  %v1438 = vpop.f32.mrb[0].mxu0
  %v1439 = vadd.f32 %v1143, %v1438
  %v1440 = vpop.f32.mrb[0].mxu0
  %1441 = vmatprep.mubr.bf16.mxu0 0
  %1442 = vmatmul.mubr.bf16.gmra.mrb[0].mxu0 %v1117
  %v1443 = vpop.f32.mrb[0].mxu0
  %v1444 = vadd.f32 %v1143, %v1443
  %v1445 = vpop.f32.mrb[0].mxu0
  %v1446 = vpop.f32.mrb[0].mxu0
  %v1447 = vadd.f32 %v1143, %v1446
  %v1448 = vpop.f32.mrb[0].mxu0
  %1449 = vmatprep.mubr.bf16.mxu0 0
  %1450 = vmatmul.mubr.bf16.gmra.mrb[0].mxu0 %v1118
  %v1451 = vpop.f32.mrb[0].mxu0
  %v1452 = vadd.f32 %v1143, %v1451
  %v1453 = vpop.f32.mrb[0].mxu0
  %v1454 = vpop.f32.mrb[0].mxu0
  %v1455 = vadd.f32 %v1143, %v1454
  %v1456 = vpop.f32.mrb[0].mxu0
  %1457 = vmatprep.mubr.bf16.mxu0 0
  %1458 = vmatmul.mubr.bf16.gmra.mrb[0].mxu0 %v1119
  %v1459 = vpop.f32.mrb[0].mxu0
  %v1460 = vadd.f32 %v1143, %v1459
  %v1461 = vpop.f32.mrb[0].mxu0
  %v1462 = vpop.f32.mrb[0].mxu0
  %v1463 = vadd.f32 %v1143, %v1462
  %v1464 = vpop.f32.mrb[0].mxu0
  %1465 = vmatprep.mubr.bf16.mxu0 0
  %1466 = vmatmul.mubr.bf16.gmra.mrb[0].mxu0 %v1120
  %v1467 = vpop.f32.mrb[0].mxu0
  %v1468 = vadd.f32 %v1143, %v1467
  %v1469 = vpop.f32.mrb[0].mxu0
  %v1470 = vpop.f32.mrb[0].mxu0
  %v1471 = vadd.f32 %v1143, %v1470
  %v1472 = vpop.f32.mrb[0].mxu0
  %1473 = vmatprep.mubr.bf16.mxu0 0
  %1474 = vmatmul.mubr.bf16.gmra.mrb[0].mxu0 %v1121
  %v1475 = vpop.f32.mrb[0].mxu0
  %v1476 = vadd.f32 %v1143, %v1475
  %v1477 = vpop.f32.mrb[0].mxu0
  %v1478 = vpop.f32.mrb[0].mxu0
  %v1479 = vadd.f32 %v1143, %v1478
  %v1480 = vpop.f32.mrb[0].mxu0
  %1481 = vdwg.mxu0
  %v1482 = vmax.f32 %v1228, 0.0
  %v1483 = vmax.f32 %v1231, 0.0
  %v1484 = vmax.f32 %v1236, 0.0
  %v1485 = vmax.f32 %v1239, 0.0
  %v1486 = vmax.f32 %v1244, 0.0
  %v1487 = vmax.f32 %v1247, 0.0
  %v1488 = vmax.f32 %v1252, 0.0
  %v1489 = vmax.f32 %v1255, 0.0
  %v1490 = vmax.f32 %v1260, 0.0
  %v1491 = vmax.f32 %v1263, 0.0
  %v1492 = vmax.f32 %v1268, 0.0
  %v1493 = vmax.f32 %v1271, 0.0
  %v1494 = vmax.f32 %v1276, 0.0
  %v1495 = vmax.f32 %v1279, 0.0
  %v1496 = vmax.f32 %v1284, 0.0
  %v1497 = vmax.f32 %v1287, 0.0
  %v1498 = vmax.f32 %v1292, 0.0
  %v1499 = vmax.f32 %v1295, 0.0
  %v1500 = vmax.f32 %v1300, 0.0
  %v1501 = vmax.f32 %v1303, 0.0
  %v1502 = vmax.f32 %v1308, 0.0
  %v1503 = vmax.f32 %v1311, 0.0
  %v1504 = vmax.f32 %v1316, 0.0
  %v1505 = vmax.f32 %v1319, 0.0
  %v1506 = vmax.f32 %v1324, 0.0
  %v1507 = vmax.f32 %v1327, 0.0
  %v1508 = vmax.f32 %v1332, 0.0
  %v1509 = vmax.f32 %v1335, 0.0
  %v1510 = vmax.f32 %v1340, 0.0
  %v1511 = vmax.f32 %v1343, 0.0
  %v1512 = vmax.f32 %v1348, 0.0
  %v1513 = vmax.f32 %v1351, 0.0
  %v1514 = vmax.f32 %v1356, 0.0
  %v1515 = vmax.f32 %v1359, 0.0
  %v1516 = vmax.f32 %v1364, 0.0
  %v1517 = vmax.f32 %v1367, 0.0
  %v1518 = vmax.f32 %v1372, 0.0
  %v1519 = vmax.f32 %v1375, 0.0
  %v1520 = vmax.f32 %v1380, 0.0
  %v1521 = vmax.f32 %v1383, 0.0
  %v1522 = vmax.f32 %v1388, 0.0
  %v1523 = vmax.f32 %v1391, 0.0
  %v1524 = vmax.f32 %v1396, 0.0
  %v1525 = vmax.f32 %v1399, 0.0
  %v1526 = vmax.f32 %v1404, 0.0
  %v1527 = vmax.f32 %v1407, 0.0
  %v1528 = vmax.f32 %v1412, 0.0
  %v1529 = vmax.f32 %v1415, 0.0
  %v1530 = vmax.f32 %v1420, 0.0
  %v1531 = vmax.f32 %v1423, 0.0
  %v1532 = vmax.f32 %v1428, 0.0
  %v1533 = vmax.f32 %v1431, 0.0
  %v1534 = vmax.f32 %v1436, 0.0
  %v1535 = vmax.f32 %v1439, 0.0
  %v1536 = vmax.f32 %v1444, 0.0
  %v1537 = vmax.f32 %v1447, 0.0
  %v1538 = vmax.f32 %v1452, 0.0
  %v1539 = vmax.f32 %v1455, 0.0
  %v1540 = vmax.f32 %v1460, 0.0
  %v1541 = vmax.f32 %v1463, 0.0
  %v1542 = vmax.f32 %v1468, 0.0
  %v1543 = vmax.f32 %v1471, 0.0
  %v1544 = vmax.f32 %v1476, 0.0
  %v1545 = vmax.f32 %v1479, 0.0
  %v1546 = vmax.f32 %v1482, %v1498
  %v1547 = vmax.f32 %v1483, %v1499
  %v1548 = vmax.f32 %v1484, %v1500
  %v1549 = vmax.f32 %v1485, %v1501
  %v1550 = vmax.f32 %v1486, %v1502
  %v1551 = vmax.f32 %v1487, %v1503
  %v1552 = vmax.f32 %v1488, %v1504
  %v1553 = vmax.f32 %v1489, %v1505
  %v1554 = vmax.f32 %v1490, %v1506
  %v1555 = vmax.f32 %v1491, %v1507
  %v1556 = vmax.f32 %v1492, %v1508
  %v1557 = vmax.f32 %v1493, %v1509
  %v1558 = vmax.f32 %v1494, %v1510
  %v1559 = vmax.f32 %v1495, %v1511
  %v1560 = vmax.f32 %v1496, %v1512
  %v1561 = vmax.f32 %v1497, %v1513
  %v1562 = vmax.f32 %v1546, %v1554
  %v1563 = vmax.f32 %v1547, %v1555
  %v1564 = vmax.f32 %v1548, %v1556
  %v1565 = vmax.f32 %v1549, %v1557
  %v1566 = vmax.f32 %v1550, %v1558
  %v1567 = vmax.f32 %v1551, %v1559
  %v1568 = vmax.f32 %v1552, %v1560
  %v1569 = vmax.f32 %v1553, %v1561
  %v1570 = vmax.f32 %v1562, %v1566
  %v1571 = vmax.f32 %v1563, %v1567
  %v1572 = vmax.f32 %v1564, %v1568
  %v1573 = vmax.f32 %v1565, %v1569
  %v1574 = vmax.f32 %v1570, %v1572
  %v1575 = vmax.f32 %v1571, %v1573
  %v1576 = vmax.f32 %v1574, %v1575
  %v1577 = vmax.f32 %v1514, %v1530
  %v1578 = vmax.f32 %v1515, %v1531
  %v1579 = vmax.f32 %v1516, %v1532
  %v1580 = vmax.f32 %v1517, %v1533
  %v1581 = vmax.f32 %v1518, %v1534
  %v1582 = vmax.f32 %v1519, %v1535
  %v1583 = vmax.f32 %v1520, %v1536
  %v1584 = vmax.f32 %v1521, %v1537
  %v1585 = vmax.f32 %v1522, %v1538
  %v1586 = vmax.f32 %v1523, %v1539
  %v1587 = vmax.f32 %v1524, %v1540
  %v1588 = vmax.f32 %v1525, %v1541
  %v1589 = vmax.f32 %v1526, %v1542
  %v1590 = vmax.f32 %v1527, %v1543
  %v1591 = vmax.f32 %v1528, %v1544
  %v1592 = vmax.f32 %v1529, %v1545
  %v1593 = vmax.f32 %v1577, %v1585
  %v1594 = vmax.f32 %v1578, %v1586
  %v1595 = vmax.f32 %v1579, %v1587
  %v1596 = vmax.f32 %v1580, %v1588
  %v1597 = vmax.f32 %v1581, %v1589
  %v1598 = vmax.f32 %v1582, %v1590
  %v1599 = vmax.f32 %v1583, %v1591
  %v1600 = vmax.f32 %v1584, %v1592
  %v1601 = vmax.f32 %v1593, %v1597
  %v1602 = vmax.f32 %v1594, %v1598
  %v1603 = vmax.f32 %v1595, %v1599
  %v1604 = vmax.f32 %v1596, %v1600
  %v1605 = vmax.f32 %v1601, %v1603
  %v1606 = vmax.f32 %v1602, %v1604
  %v1607 = vmax.f32 %v1605, %v1606
  %p1608 = scmp.eq.s32.totalorder 0, 0
  // Predicated region
  $region30: #{pointnet_encoder_forward.1} parent=0 // pred_check
    %p1609 = pneg %p1608
  $region31: #{pointnet_encoder_forward.1} parent=0 // pred_check_branch
    %1611 = sbr.rel (%p1609) target = $region33
  $region32: #{pointnet_encoder_forward.1} parent=0 // pred_region
    %1612 = vst [vmem:[%s7] sm:$0xff] %v1576
    %s1613 = scalar_lea.vmem %s7, 8
    %1614 = vst [vmem:[%s1613] sm:$0xff] %v1607
  $region33: #{pointnet_encoder_forward.1} parent=0 // pred_fallthru
    _
  %p1615 = scmp.gt.s32.totalorder 0, 0
  // Predicated region
  $region34: #{pointnet_encoder_forward.1} parent=0 // pred_check
    %p1616 = pneg %p1615
  $region35: #{pointnet_encoder_forward.1} parent=0 // pred_check_branch
    %1618 = sbr.rel (%p1616) target = $region37
  $region36: #{pointnet_encoder_forward.1} parent=0 // pred_region
    %v1619 = vld [vmem:[%s7] sm:$0xff]
    %v1620 = vmax.f32 %v1619, %v1576
    %1621 = vst [vmem:[%s7] sm:$0xff] %v1620
    %s1622 = scalar_lea.vmem %s7, 8
    %v1623 = vld [vmem:[%s1622] sm:$0xff]
    %v1624 = vmax.f32 %v1623, %v1607
    %1625 = vst [vmem:[%s1622] sm:$0xff] %v1624
  $region37: #{pointnet_encoder_forward.1} parent=0 // pred_fallthru
    _
  // Predicated region
  $region38: #{pointnet_encoder_forward.1} parent=0 // pred_check
    _
  $region39: #{pointnet_encoder_forward.1} parent=0 // pred_check_branch
    %1627 = sbr.rel (0) target = $region41
  $region40: #{pointnet_encoder_forward.1} parent=0 // pred_region
    _
  $region41: #{pointnet_encoder_forward.1} parent=0 // pred_fallthru
    _
  // Predicated region
  $region42: #{pointnet_encoder_forward.1} parent=0 // pred_check
    _
  $region43: #{pointnet_encoder_forward.1} parent=0 // pred_check_branch
    %1629 = sbr.rel (0) target = $region45
  $region44: #{pointnet_encoder_forward.1} parent=0 // pred_region
    _
  $region45: #{pointnet_encoder_forward.1} parent=0 // pred_fallthru
    _

</llo_original>
